<compile_context>
chip_gen: v7x
topology: tpu7x:2x2x1
jax: 0.10.0
libtpu: 0.0.40
codegen_flags: <defaults>
</compile_context>

<pallas_src>
import functools
import math

import jax
import jax.numpy as jnp
from jax import lax
from jax.experimental import pallas as pl
from jax.experimental.pallas import tpu as pltpu


# ----------------------------------------------------------------------------
# Fused VarianceAdaptor kernel: both predictor heads + pitch embed + residual.
# Runs exactly once (grid=(1,)) over the flattened (B*T, C) batch.
# ----------------------------------------------------------------------------
def _fused_adaptor_kernel(lens_ref,                 # (B,) int32 scalar-prefetch (SMEM)
                          x_ref,                    # (B*T, C) f32
                          w1_ref,                   # (K*C, 2F) f32 fused conv1
                          w2_ref,                   # (K*2F, 2F) f32 fused conv2 (block-diag)
                          rows_ref,                 # (9, 2F) f32 packed small params
                          bins_ref,                 # (1, NB-1) f32 pitch bins
                          table_ref,                # (NB, C) f32 pitch embedding table
                          out_x_ref,                # (B*T, C) f32  x + pitch_emb
                          out_p_ref,                # (B*T, 2) f32  [log_dur, pitch]
                          *, B, T, K, F):
    BT = B * T
    C = x_ref.shape[1]
    twoF = 2 * F
    pad = (K - 1) // 2
    NB = table_ref.shape[0]
    eps = 1e-5

    # ---- constants: built once (single grid step), pure VPU iota/compare ----
    row = lax.broadcasted_iota(jnp.int32, (BT, 1), 0)
    # batch / within-sample time index without integer div/mod (B is tiny).
    b_idx = jnp.zeros_like(row)
    for b in range(1, B):
        b_idx = b_idx + (row >= b * T).astype(jnp.int32)
    t_idx = row - b_idx * T

    lane2f = lax.broadcasted_iota(jnp.int32, (1, twoF), 1)
    half_d = (lane2f < F).astype(jnp.float32)        # duration-head lanes
    half_p = 1.0 - half_d                            # pitch-head lanes

    # keep mask from scalar-prefetched valid lengths: 1.0 = valid frame.
    keep_b = jnp.logical_and(b_idx == 0, t_idx < lens_ref[0])
    for b in range(1, B):
        keep_b = jnp.logical_or(
            keep_b, jnp.logical_and(b_idx == b, t_idx < lens_ref[b]))
    keep = keep_b.astype(jnp.float32)                # (BT, 1)

    x = x_ref[...]                                   # (BT, C) f32
    # VariancePredictor zeroes masked positions of its input.
    x_m = x * keep

    def conv_slab(y):
        # Build the (BT, K*W) shifted-input slab for a 'same' Conv1d:
        # part k holds y[t + (k - pad)] with zeros outside [0, T) per sample.
        # pltpu.roll moves data on the XLU; the boundary mask also kills
        # cross-sample bleed (the wrapped row always lands on a masked row).
        parts = []
        for d in range(-pad, pad + 1):
            if d == 0:
                parts.append(y)
            else:
                rolled = pltpu.roll(y, shift=(-d) % BT, axis=0)
                valid = jnp.logical_and(t_idx + d >= 0, t_idx + d < T)
                parts.append(rolled * valid.astype(jnp.float32))
        return jnp.concatenate(parts, axis=-1).astype(jnp.bfloat16)

    def layer_norm_halves(h, g_row, be_row):
        # Per-head LayerNorm over F lanes, computed on the fused (BT, 2F) slab
        # with lane-mask reductions (two-pass, f32; no lane-dim splits).
        m_d = jnp.sum(h * half_d, axis=-1, keepdims=True) / F
        m_p = jnp.sum(h * half_p, axis=-1, keepdims=True) / F
        m = m_d * half_d + m_p * half_p
        c = h - m
        v_d = jnp.sum(c * c * half_d, axis=-1, keepdims=True) / F
        v_p = jnp.sum(c * c * half_p, axis=-1, keepdims=True) / F
        var = v_d * half_d + v_p * half_p
        return c * lax.rsqrt(var + eps) * g_row + be_row

    # packed small params (rows of the (9, 2F) slab)
    b1, g1, be1 = rows_ref[0:1, :], rows_ref[1:2, :], rows_ref[2:3, :]
    b2, g2, be2 = rows_ref[3:4, :], rows_ref[4:5, :], rows_ref[5:6, :]
    wld, wlp = rows_ref[6:7, :], rows_ref[7:8, :]    # Linear rows (other half zero)
    bld, blp = rows_ref[8:9, 0:1], rows_ref[8:9, 1:2]

    # MXU operands in bf16 (f32 accumulate); params stay f32 in HBM/VMEM.
    w1 = w1_ref[...].astype(jnp.bfloat16)
    w2 = w2_ref[...].astype(jnp.bfloat16)

    # Conv1 (both heads, one matmul) -> ReLU -> LN
    h = jnp.dot(conv_slab(x_m), w1, preferred_element_type=jnp.float32)
    h = layer_norm_halves(jnp.maximum(h + b1, 0.0), g1, be1)
    # Conv2 (block-diagonal, one matmul) -> ReLU -> LN
    h = jnp.dot(conv_slab(h), w2, preferred_element_type=jnp.float32)
    h = layer_norm_halves(jnp.maximum(h + b2, 0.0), g2, be2)

    # Linear(F -> 1) per head as VPU multiply + lane reduction; masked output.
    log_dur = (jnp.sum(h * wld, axis=-1, keepdims=True) + bld) * keep
    pitch = (jnp.sum(h * wlp, axis=-1, keepdims=True) + blp) * keep

    # torch.bucketize(v, bins, right=False) == #boundaries strictly < v, then
    # embedding lookup as a one-hot matmul + residual add while x is resident.
    # One tiny (BT, NB) x (NB, C) f32 matmul; kept f32 so the residual add is
    # exact (cheap even on v5e's multi-pass f32 MXU at this size).
    bins = bins_ref[...]                                          # (1, NB-1)
    idx = jnp.sum((pitch > bins).astype(jnp.int32), axis=-1, keepdims=True)
    onehot = (idx == lax.broadcasted_iota(jnp.int32, (BT, NB), 1)).astype(jnp.float32)
    emb = jnp.dot(onehot, table_ref[...], preferred_element_type=jnp.float32)

    out_x_ref[...] = x + emb
    # NOTE: 2-lane output lowers to a masked partial store; total bytes are
    # tiny so this is knowingly accepted (review: sub-microsecond).
    out_p_ref[...] = jnp.concatenate([log_dur, pitch], axis=-1)


def fused_variance_adaptor(x_reg, x_len, params):
    """Single single-step pallas_call: both heads + pitch embed + residual add.

    Returns:
      x_plus_emb: (B, T, C) f32  = x + pitch_emb(bucketize(pitch_prediction))
      preds:      (B, T, 2) f32  = [log_duration_prediction, pitch_prediction]
    """
    B, T, C = x_reg.shape
    BT = B * T
    twoF = params["rows"].shape[1]
    F = twoF // 2
    K = params["w1"].shape[0] // C
    NB = params["pitch_emb"].shape[0]

    x_flat = x_reg.reshape(BT, C)

    def full(*shape):   # full-array (VMEM-resident) operand, single block
        return pl.BlockSpec(shape, lambda i, lens: (0,) * len(shape))

    grid_spec = pltpu.PrefetchScalarGridSpec(
        num_scalar_prefetch=1,          # x_len lives in SMEM before the grid runs
        grid=(1,),                      # single step: whole batch in one launch
        in_specs=[
            full(BT, C),
            full(K * C, twoF), full(K * twoF, twoF), full(9, twoF),
            full(1, NB - 1), full(NB, C),
        ],
        out_specs=(full(BT, C), full(BT, 2)),
    )
    # VMEM note: at B*T=32, C=F=32 the footprint is a few tens of KiB — far
    # below the scoped-VMEM default (16 MiB v5e / 32 MiB v6e,v7x) and the v7x
    # 64 MiB physical ceiling.  If T grows to utterance length, tile the time
    # axis (with a K-1 halo for the 'same' conv) and set vmem_limit_bytes.
    kernel = functools.partial(_fused_adaptor_kernel, B=B, T=T, K=K, F=F)
    out_x, preds = pl.pallas_call(
        kernel,
        out_shape=(jax.ShapeDtypeStruct((BT, C), jnp.float32),
                   jax.ShapeDtypeStruct((BT, 2), jnp.float32)),
        grid_spec=grid_spec,
        compiler_params=pltpu.CompilerParams(
            dimension_semantics=("arbitrary",)),
    )(x_len.astype(jnp.int32), x_flat,
      params["w1"], params["w2"], params["rows"],
      params["pitch_bins"], params["pitch_emb"])
    return out_x.reshape(B, T, C), preds.reshape(B, T, 2)


# ----------------------------------------------------------------------------
# LengthRegulator (plain JAX glue: data-dependent repeat with dynamic lengths).
# TODO(synk): dynamic-length repeat/gather stays in JAX; a Pallas version would
#             need scalar-prefetched per-row gather (pl.Element).
# ----------------------------------------------------------------------------
def length_regulate(x, durations, max_len):
    """x: (B, T, C), durations: (B, T) int.  Pads/truncates output to max_len."""
    B, T, _ = x.shape
    cum = jnp.cumsum(durations.astype(jnp.int32), axis=1)         # (B, T)
    total = cum[:, -1]                                            # (B,)
    pos = jnp.arange(max_len, dtype=jnp.int32)                    # (max_len,)
    src = jax.vmap(lambda c: jnp.searchsorted(c, pos, side="right"))(cum)
    src = jnp.clip(src, 0, T - 1)                                 # (B, max_len)
    out = jnp.take_along_axis(x, src[:, :, None], axis=1)         # (B, max_len, C)
    valid = pos[None, :] < total[:, None]                         # (B, max_len)
    out = out * valid[:, :, None].astype(x.dtype)
    return out, jnp.minimum(total, max_len), valid


# ----------------------------------------------------------------------------
# Parameters (deterministic synthetic init; shapes follow the PyTorch module,
# then packed host-side into the fused-head / fused-tap layout).
# ----------------------------------------------------------------------------
def _init_vp_raw(key, input_dim, n_filter, kernel_size):
    k1, k2, k3, k4, k5, k6 = jax.random.split(key, 6)
    s1 = 1.0 / math.sqrt(input_dim * kernel_size)
    s2 = 1.0 / math.sqrt(n_filter * kernel_size)
    s3 = 1.0 / math.sqrt(n_filter)
    return {
        # conv weights as (K, Cin, Cout) == torch (Cout, Cin, K) transposed.
        "w1": jax.random.uniform(k1, (kernel_size, input_dim, n_filter),
                                 jnp.float32, -s1, s1),
        "b1": jax.random.uniform(k2, (n_filter,), jnp.float32, -s1, s1),
        "w2": jax.random.uniform(k3, (kernel_size, n_filter, n_filter),
                                 jnp.float32, -s2, s2),
        "b2": jax.random.uniform(k4, (n_filter,), jnp.float32, -s2, s2),
        "wl": jax.random.uniform(k5, (n_filter,), jnp.float32, -s3, s3),
        "bl": jax.random.uniform(k6, (), jnp.float32, -s3, s3),
    }


def init_params(key, input_dim, n_filter, kernel_size, n_pitch_bin,
                pitch_min, pitch_max):
    C, F, K = input_dim, n_filter, kernel_size
    kd, kp, ke = jax.random.split(key, 3)
    d = _init_vp_raw(kd, C, F, K)
    p = _init_vp_raw(kp, C, F, K)

    # Fused conv1: duration|pitch heads concatenated along Cout, taps packed
    # along rows -> (K*C, 2F); matches the in-kernel (BT, K*C) shifted slab.
    w1f = jnp.concatenate([d["w1"], p["w1"]], axis=-1).reshape(K * C, 2 * F)

    # Fused conv2: per-tap block-diagonal (2F, 2F), taps packed -> (K*2F, 2F).
    zer = jnp.zeros((K, F, F), jnp.float32)
    w2_blk = jnp.concatenate(
        [jnp.concatenate([d["w2"], zer], axis=-1),
         jnp.concatenate([zer, p["w2"]], axis=-1)], axis=1)        # (K, 2F, 2F)
    w2f = w2_blk.reshape(K * 2 * F, 2 * F)

    ones2f = jnp.ones((2 * F,), jnp.float32)
    zeros2f = jnp.zeros((2 * F,), jnp.float32)
    zf = jnp.zeros((F,), jnp.float32)
    bl_row = zeros2f.at[0].set(d["bl"]).at[1].set(p["bl"])
    rows = jnp.stack([
        jnp.concatenate([d["b1"], p["b1"]]),     # conv1 bias (both heads)
        ones2f,                                  # LayerNorm1 gamma
        zeros2f,                                 # LayerNorm1 beta
        jnp.concatenate([d["b2"], p["b2"]]),     # conv2 bias
        ones2f,                                  # LayerNorm2 gamma
        zeros2f,                                 # LayerNorm2 beta
        jnp.concatenate([d["wl"], zf]),          # Linear(F->1) dur row
        jnp.concatenate([zf, p["wl"]]),          # Linear(F->1) pitch row
        bl_row,                                  # [bl_dur, bl_pitch, 0, ...]
    ], axis=0)                                   # (9, 2F)

    return {
        "w1": w1f,            # f32; cast to bf16 inside the kernel for the MXU
        "w2": w2f,
        "rows": rows,
        "pitch_bins": jnp.linspace(math.log(pitch_min + 1.0),
                                   math.log(pitch_max + 1.0),
                                   n_pitch_bin - 1,
                                   dtype=jnp.float32).reshape(1, n_pitch_bin - 1),
        "pitch_emb": jax.random.normal(ke, (n_pitch_bin, input_dim), jnp.float32),
    }


# ----------------------------------------------------------------------------
# VarianceAdaptor forward.
# ----------------------------------------------------------------------------
def _variance_adaptor_forward(params, x, x_type, duration_target=None,
                              pitch_target=None, d_control=1.0,
                              max_reg_len=16, max_out_len=48):
    """x: (B, C, T_in) (matches torch input before .permute(0, 2, 1)),
    x_type: (B, T_in) int durations for the first length regulation."""
    x_btc = jnp.transpose(x, (0, 2, 1))
    x_reg, x_len, valid = length_regulate(x_btc, x_type, max_reg_len)

    # get_content_mask(x_len).unsqueeze(2): True => padding.
    x_mask = ~valid[:, :, None]                                   # (B, T, 1) bool

    x_plus, preds = fused_variance_adaptor(x_reg, x_len, params)
    log_duration_prediction = preds[..., 0]                       # (B, T)
    pitch_prediction = preds[..., 1]                              # (B, T)

    if pitch_target is not None:
        # Teacher-forced pitch path: bucketize the target instead (JAX glue;
        # the fused in-kernel embedding-add covers the inference path).
        vals = jnp.log(pitch_target.astype(jnp.float32) + 1.0)
        idx = jnp.sum(vals[..., None] > params["pitch_bins"][0][None, None, :],
                      axis=-1)
        x_plus = x_reg + params["pitch_emb"][idx]

    if duration_target is not None:
        durations = duration_target
    else:
        # torch: round(exp(log_d) - 1).clamp(min=0) * d_control
        durations = jnp.maximum(
            jnp.round(jnp.exp(log_duration_prediction) - 1.0), 0.0) * d_control
    durations = durations.astype(jnp.int32)

    output, output_len, _ = length_regulate(x_plus, durations, max_out_len)

    return (output, output_len, pitch_prediction, log_duration_prediction, x_mask)


variance_adaptor_forward = jax.jit(
    _variance_adaptor_forward, static_argnames=("max_reg_len", "max_out_len"))


if __name__ == "__main__":
    key = jax.random.PRNGKey(0)
    B, C, T_IN = 2, 32, 8          # batch, input_dim, phoneme-sequence length
    N_FILTER, K_SIZE = 32, 3       # n_conv_filter, conv_kernel_size
    N_PITCH_BIN = 16
    PITCH_MIN, PITCH_MAX = 50.0, 500.0
    MAX_REG_LEN, MAX_OUT_LEN = 16, 48

    k_param, k_x, k_d = jax.random.split(key, 3)
    params = init_params(k_param, C, N_FILTER, K_SIZE, N_PITCH_BIN,
                         PITCH_MIN, PITCH_MAX)

    x = jax.random.normal(k_x, (B, C, T_IN), jnp.float32)          # (B, C, T_in)
    x_type = jax.random.randint(k_d, (B, T_IN), 1, 3)               # durations 1..2

    outs = variance_adaptor_forward(params, x, x_type,
                                    duration_target=None, pitch_target=None,
                                    d_control=1.0,
                                    max_reg_len=MAX_REG_LEN,
                                    max_out_len=MAX_OUT_LEN)
    jax.block_until_ready(outs)
    output, output_len, pitch_pred, log_dur_pred, x_mask = outs
    assert output.shape == (B, MAX_OUT_LEN, C)
    assert pitch_pred.shape == (B, MAX_REG_LEN)
    assert log_dur_pred.shape == (B, MAX_REG_LEN)
    assert x_mask.shape == (B, MAX_REG_LEN, 1)
    assert bool(jnp.all(jnp.isfinite(output)))
    print("KERNEL_OK")
</pallas_src>

<mosaic_0001>
module attributes {stable_mosaic.version = 11 : i64} {
  func.func @_fused_adaptor_kernel(%arg0: i32, %arg1: memref<2xi32, #tpu.memory_space<smem>>, %arg2: memref<32x32xf32, #tpu.memory_space<vmem>>, %arg3: memref<96x64xf32, #tpu.memory_space<vmem>>, %arg4: memref<192x64xf32, #tpu.memory_space<vmem>>, %arg5: memref<9x64xf32, #tpu.memory_space<vmem>>, %arg6: memref<1x15xf32, #tpu.memory_space<vmem>>, %arg7: memref<16x32xf32, #tpu.memory_space<vmem>>, %arg8: memref<32x32xf32, #tpu.memory_space<vmem>>, %arg9: memref<32x2xf32, #tpu.memory_space<vmem>>) attributes {dimension_semantics = [#tpu.dimension_semantics<arbitrary>], iteration_bounds = array<i64: 1>, scalar_prefetch = 1 : i64, scratch_operands = 0 : i64, tpu.core_type = #tpu.core_type<tc>, window_params = [{pipeline_mode = #tpu.pipeline_mode<synchronous>, transform_indices = @transform_0, window_bounds = array<i64: 32, 32>}, {pipeline_mode = #tpu.pipeline_mode<synchronous>, transform_indices = @transform_1, window_bounds = array<i64: 96, 64>}, {pipeline_mode = #tpu.pipeline_mode<synchronous>, transform_indices = @transform_2, window_bounds = array<i64: 192, 64>}, {pipeline_mode = #tpu.pipeline_mode<synchronous>, transform_indices = @transform_3, window_bounds = array<i64: 9, 64>}, {pipeline_mode = #tpu.pipeline_mode<synchronous>, transform_indices = @transform_4, window_bounds = array<i64: 1, 15>}, {pipeline_mode = #tpu.pipeline_mode<synchronous>, transform_indices = @transform_5, window_bounds = array<i64: 16, 32>}, {pipeline_mode = #tpu.pipeline_mode<synchronous>, transform_indices = @transform_6, window_bounds = array<i64: 32, 32>}, {pipeline_mode = #tpu.pipeline_mode<synchronous>, transform_indices = @transform_7, window_bounds = array<i64: 32, 2>}]} {
    %0 = tpu.iota {dimensions = array<i32: 0>} : vector<32x1xi32>
    %c0_i32 = arith.constant 0 : i32
    %1 = vector.broadcast %c0_i32 : i32 to vector<32x1xi32>
    %c16_i32 = arith.constant 16 : i32
    %2 = vector.broadcast %c16_i32 : i32 to vector<32x1xi32>
    %3 = arith.cmpi sge, %0, %2 : vector<32x1xi32>
    %4 = arith.extui %3 : vector<32x1xi1> to vector<32x1xi32>
    %5 = arith.addi %1, %4 : vector<32x1xi32>
    %c16_i32_0 = arith.constant 16 : i32
    %6 = vector.broadcast %c16_i32_0 : i32 to vector<32x1xi32>
    %7 = arith.muli %5, %6 : vector<32x1xi32>
    %8 = arith.subi %0, %7 : vector<32x1xi32>
    %9 = tpu.iota {dimensions = array<i32: 1>} : vector<1x64xi32>
    %c32_i32 = arith.constant 32 : i32
    %10 = vector.broadcast %c32_i32 : i32 to vector<1x64xi32>
    %11 = arith.cmpi slt, %9, %10 : vector<1x64xi32>
    %12 = arith.extui %11 : vector<1x64xi1> to vector<1x64xi32>
    %13 = arith.sitofp %12 : vector<1x64xi32> to vector<1x64xf32>
    %cst = arith.constant 1.000000e+00 : f32
    %14 = vector.broadcast %cst : f32 to vector<1x64xf32>
    %15 = arith.subf %14, %13 : vector<1x64xf32>
    %c0_i32_1 = arith.constant 0 : i32
    %16 = vector.broadcast %c0_i32_1 : i32 to vector<32x1xi32>
    %17 = arith.cmpi eq, %5, %16 : vector<32x1xi32>
    %c0 = arith.constant 0 : index
    %18 = memref.load %arg1[%c0] : memref<2xi32, #tpu.memory_space<smem>>
    %19 = vector.broadcast %18 : i32 to vector<32x1xi32>
    %20 = arith.cmpi slt, %8, %19 : vector<32x1xi32>
    %21 = arith.andi %17, %20 : vector<32x1xi1>
    %c1_i32 = arith.constant 1 : i32
    %22 = vector.broadcast %c1_i32 : i32 to vector<32x1xi32>
    %23 = arith.cmpi eq, %5, %22 : vector<32x1xi32>
    %c1 = arith.constant 1 : index
    %24 = memref.load %arg1[%c1] : memref<2xi32, #tpu.memory_space<smem>>
    %25 = vector.broadcast %24 : i32 to vector<32x1xi32>
    %26 = arith.cmpi slt, %8, %25 : vector<32x1xi32>
    %27 = arith.andi %23, %26 : vector<32x1xi1>
    %28 = arith.ori %21, %27 : vector<32x1xi1>
    %29 = arith.extui %28 : vector<32x1xi1> to vector<32x1xi32>
    %30 = arith.sitofp %29 : vector<32x1xi32> to vector<32x1xf32>
    %c0_2 = arith.constant 0 : index
    %c0_3 = arith.constant 0 : index
    %31 = vector.load %arg2[%c0_2, %c0_3] : memref<32x32xf32, #tpu.memory_space<vmem>>, vector<32x32xf32>
    %32 = vector.broadcast %30 : vector<32x1xf32> to vector<32x32xf32>
    %33 = arith.mulf %31, %32 : vector<32x32xf32>
    %c0_4 = arith.constant 0 : index
    %c0_5 = arith.constant 0 : index
    %34 = vector.load %arg5[%c0_4, %c0_5] : memref<9x64xf32, #tpu.memory_space<vmem>>, vector<1x64xf32>
    %c1_6 = arith.constant 1 : index
    %c0_7 = arith.constant 0 : index
    %35 = vector.load %arg5[%c1_6, %c0_7] : memref<9x64xf32, #tpu.memory_space<vmem>>, vector<1x64xf32>
    %c2 = arith.constant 2 : index
    %c0_8 = arith.constant 0 : index
    %36 = vector.load %arg5[%c2, %c0_8] : memref<9x64xf32, #tpu.memory_space<vmem>>, vector<1x64xf32>
    %c3 = arith.constant 3 : index
    %c0_9 = arith.constant 0 : index
    %37 = vector.load %arg5[%c3, %c0_9] : memref<9x64xf32, #tpu.memory_space<vmem>>, vector<1x64xf32>
    %c4 = arith.constant 4 : index
    %c0_10 = arith.constant 0 : index
    %38 = vector.load %arg5[%c4, %c0_10] : memref<9x64xf32, #tpu.memory_space<vmem>>, vector<1x64xf32>
    %c5 = arith.constant 5 : index
    %c0_11 = arith.constant 0 : index
    %39 = vector.load %arg5[%c5, %c0_11] : memref<9x64xf32, #tpu.memory_space<vmem>>, vector<1x64xf32>
    %c6 = arith.constant 6 : index
    %c0_12 = arith.constant 0 : index
    %40 = vector.load %arg5[%c6, %c0_12] : memref<9x64xf32, #tpu.memory_space<vmem>>, vector<1x64xf32>
    %c7 = arith.constant 7 : index
    %c0_13 = arith.constant 0 : index
    %41 = vector.load %arg5[%c7, %c0_13] : memref<9x64xf32, #tpu.memory_space<vmem>>, vector<1x64xf32>
    %c8 = arith.constant 8 : index
    %c0_14 = arith.constant 0 : index
    %42 = vector.load %arg5[%c8, %c0_14] : memref<9x64xf32, #tpu.memory_space<vmem>>, vector<1x1xf32>
    %c8_15 = arith.constant 8 : index
    %c1_16 = arith.constant 1 : index
    %43 = vector.load %arg5[%c8_15, %c1_16] : memref<9x64xf32, #tpu.memory_space<vmem>>, vector<1x1xf32>
    %c0_17 = arith.constant 0 : index
    %c0_18 = arith.constant 0 : index
    %44 = vector.load %arg3[%c0_17, %c0_18] : memref<96x64xf32, #tpu.memory_space<vmem>>, vector<96x64xf32>
    %45 = arith.truncf %44 : vector<96x64xf32> to vector<96x64xbf16>
    %c0_19 = arith.constant 0 : index
    %c0_20 = arith.constant 0 : index
    %46 = vector.load %arg4[%c0_19, %c0_20] : memref<192x64xf32, #tpu.memory_space<vmem>>, vector<192x64xf32>
    %47 = arith.truncf %46 : vector<192x64xf32> to vector<192x64xbf16>
    %c1_i32_21 = arith.constant 1 : i32
    %48 = tpu.dynamic_rotate %33 by %c1_i32_21 dim 0 : vector<32x32xf32>, i32 -> vector<32x32xf32>
    %c-1_i32 = arith.constant -1 : i32
    %49 = vector.broadcast %c-1_i32 : i32 to vector<32x1xi32>
    %50 = arith.addi %8, %49 : vector<32x1xi32>
    %c0_i32_22 = arith.constant 0 : i32
    %51 = vector.broadcast %c0_i32_22 : i32 to vector<32x1xi32>
    %52 = arith.cmpi sge, %50, %51 : vector<32x1xi32>
    %c-1_i32_23 = arith.constant -1 : i32
    %53 = vector.broadcast %c-1_i32_23 : i32 to vector<32x1xi32>
    %54 = arith.addi %8, %53 : vector<32x1xi32>
    %c16_i32_24 = arith.constant 16 : i32
    %55 = vector.broadcast %c16_i32_24 : i32 to vector<32x1xi32>
    %56 = arith.cmpi slt, %54, %55 : vector<32x1xi32>
    %57 = arith.andi %52, %56 : vector<32x1xi1>
    %58 = arith.extui %57 : vector<32x1xi1> to vector<32x1xi32>
    %59 = arith.sitofp %58 : vector<32x1xi32> to vector<32x1xf32>
    %60 = vector.broadcast %59 : vector<32x1xf32> to vector<32x32xf32>
    %61 = arith.mulf %48, %60 : vector<32x32xf32>
    %c31_i32 = arith.constant 31 : i32
    %62 = tpu.dynamic_rotate %33 by %c31_i32 dim 0 : vector<32x32xf32>, i32 -> vector<32x32xf32>
    %c1_i32_25 = arith.constant 1 : i32
    %63 = vector.broadcast %c1_i32_25 : i32 to vector<32x1xi32>
    %64 = arith.addi %8, %63 : vector<32x1xi32>
    %c0_i32_26 = arith.constant 0 : i32
    %65 = vector.broadcast %c0_i32_26 : i32 to vector<32x1xi32>
    %66 = arith.cmpi sge, %64, %65 : vector<32x1xi32>
    %c1_i32_27 = arith.constant 1 : i32
    %67 = vector.broadcast %c1_i32_27 : i32 to vector<32x1xi32>
    %68 = arith.addi %8, %67 : vector<32x1xi32>
    %c16_i32_28 = arith.constant 16 : i32
    %69 = vector.broadcast %c16_i32_28 : i32 to vector<32x1xi32>
    %70 = arith.cmpi slt, %68, %69 : vector<32x1xi32>
    %71 = arith.andi %66, %70 : vector<32x1xi1>
    %72 = arith.extui %71 : vector<32x1xi1> to vector<32x1xi32>
    %73 = arith.sitofp %72 : vector<32x1xi32> to vector<32x1xf32>
    %74 = vector.broadcast %73 : vector<32x1xf32> to vector<32x32xf32>
    %75 = arith.mulf %62, %74 : vector<32x32xf32>
    %76 = tpu.concatenate %61, %33, %75 in 1 : vector<32x32xf32>, vector<32x32xf32>, vector<32x32xf32> -> vector<32x96xf32>
    %77 = arith.truncf %76 : vector<32x96xf32> to vector<32x96xbf16>
    %cst_29 = arith.constant dense<0.000000e+00> : vector<32x64xf32>
    %78 = tpu.matmul %77, %45, %cst_29 {dimension_numbers = #tpu.dot_dimension_numbers<[1], [0], [0], [1], [0, 0, 1, 1], [], []>} : vector<32x96xbf16>, vector<96x64xbf16>, vector<32x64xf32> -> vector<32x64xf32>
    %79 = vector.broadcast %34 : vector<1x64xf32> to vector<32x64xf32>
    %80 = arith.addf %78, %79 : vector<32x64xf32>
    %cst_30 = arith.constant 0.000000e+00 : f32
    %81 = vector.broadcast %cst_30 : f32 to vector<32x64xf32>
    %82 = arith.maximumf %80, %81 : vector<32x64xf32>
    %83 = vector.broadcast %13 : vector<1x64xf32> to vector<32x64xf32>
    %84 = arith.mulf %82, %83 : vector<32x64xf32>
    %cst_31 = arith.constant dense<0.000000e+00> : vector<32xf32>
    %85 = vector.multi_reduction <add>, %84, %cst_31 [1] : vector<32x64xf32> to vector<32xf32>
    %86 = vector.shape_cast %85 : vector<32xf32> to vector<32x1xf32>
    %cst_32 = arith.constant 3.200000e+01 : f32
    %87 = vector.broadcast %cst_32 : f32 to vector<32x1xf32>
    %88 = arith.divf %86, %87 : vector<32x1xf32>
    %89 = vector.broadcast %15 : vector<1x64xf32> to vector<32x64xf32>
    %90 = arith.mulf %82, %89 : vector<32x64xf32>
    %cst_33 = arith.constant dense<0.000000e+00> : vector<32xf32>
    %91 = vector.multi_reduction <add>, %90, %cst_33 [1] : vector<32x64xf32> to vector<32xf32>
    %92 = vector.shape_cast %91 : vector<32xf32> to vector<32x1xf32>
    %cst_34 = arith.constant 3.200000e+01 : f32
    %93 = vector.broadcast %cst_34 : f32 to vector<32x1xf32>
    %94 = arith.divf %92, %93 : vector<32x1xf32>
    %95 = vector.broadcast %88 : vector<32x1xf32> to vector<32x64xf32>
    %96 = vector.broadcast %13 : vector<1x64xf32> to vector<32x64xf32>
    %97 = arith.mulf %95, %96 : vector<32x64xf32>
    %98 = vector.broadcast %94 : vector<32x1xf32> to vector<32x64xf32>
    %99 = vector.broadcast %15 : vector<1x64xf32> to vector<32x64xf32>
    %100 = arith.mulf %98, %99 : vector<32x64xf32>
    %101 = arith.addf %97, %100 : vector<32x64xf32>
    %102 = arith.subf %82, %101 : vector<32x64xf32>
    %103 = arith.mulf %102, %102 : vector<32x64xf32>
    %104 = vector.broadcast %13 : vector<1x64xf32> to vector<32x64xf32>
    %105 = arith.mulf %103, %104 : vector<32x64xf32>
    %cst_35 = arith.constant dense<0.000000e+00> : vector<32xf32>
    %106 = vector.multi_reduction <add>, %105, %cst_35 [1] : vector<32x64xf32> to vector<32xf32>
    %107 = vector.shape_cast %106 : vector<32xf32> to vector<32x1xf32>
    %cst_36 = arith.constant 3.200000e+01 : f32
    %108 = vector.broadcast %cst_36 : f32 to vector<32x1xf32>
    %109 = arith.divf %107, %108 : vector<32x1xf32>
    %110 = arith.mulf %102, %102 : vector<32x64xf32>
    %111 = vector.broadcast %15 : vector<1x64xf32> to vector<32x64xf32>
    %112 = arith.mulf %110, %111 : vector<32x64xf32>
    %cst_37 = arith.constant dense<0.000000e+00> : vector<32xf32>
    %113 = vector.multi_reduction <add>, %112, %cst_37 [1] : vector<32x64xf32> to vector<32xf32>
    %114 = vector.shape_cast %113 : vector<32xf32> to vector<32x1xf32>
    %cst_38 = arith.constant 3.200000e+01 : f32
    %115 = vector.broadcast %cst_38 : f32 to vector<32x1xf32>
    %116 = arith.divf %114, %115 : vector<32x1xf32>
    %117 = vector.broadcast %109 : vector<32x1xf32> to vector<32x64xf32>
    %118 = vector.broadcast %13 : vector<1x64xf32> to vector<32x64xf32>
    %119 = arith.mulf %117, %118 : vector<32x64xf32>
    %120 = vector.broadcast %116 : vector<32x1xf32> to vector<32x64xf32>
    %121 = vector.broadcast %15 : vector<1x64xf32> to vector<32x64xf32>
    %122 = arith.mulf %120, %121 : vector<32x64xf32>
    %123 = arith.addf %119, %122 : vector<32x64xf32>
    %cst_39 = arith.constant 9.99999974E-6 : f32
    %124 = vector.broadcast %cst_39 : f32 to vector<32x64xf32>
    %125 = arith.addf %123, %124 : vector<32x64xf32>
    %126 = math.rsqrt %125 : vector<32x64xf32>
    %127 = arith.mulf %102, %126 : vector<32x64xf32>
    %128 = vector.broadcast %35 : vector<1x64xf32> to vector<32x64xf32>
    %129 = arith.mulf %127, %128 : vector<32x64xf32>
    %130 = vector.broadcast %36 : vector<1x64xf32> to vector<32x64xf32>
    %131 = arith.addf %129, %130 : vector<32x64xf32>
    %c1_i32_40 = arith.constant 1 : i32
    %132 = tpu.dynamic_rotate %131 by %c1_i32_40 dim 0 : vector<32x64xf32>, i32 -> vector<32x64xf32>
    %c-1_i32_41 = arith.constant -1 : i32
    %133 = vector.broadcast %c-1_i32_41 : i32 to vector<32x1xi32>
    %134 = arith.addi %8, %133 : vector<32x1xi32>
    %c0_i32_42 = arith.constant 0 : i32
    %135 = vector.broadcast %c0_i32_42 : i32 to vector<32x1xi32>
    %136 = arith.cmpi sge, %134, %135 : vector<32x1xi32>
    %c-1_i32_43 = arith.constant -1 : i32
    %137 = vector.broadcast %c-1_i32_43 : i32 to vector<32x1xi32>
    %138 = arith.addi %8, %137 : vector<32x1xi32>
    %c16_i32_44 = arith.constant 16 : i32
    %139 = vector.broadcast %c16_i32_44 : i32 to vector<32x1xi32>
    %140 = arith.cmpi slt, %138, %139 : vector<32x1xi32>
    %141 = arith.andi %136, %140 : vector<32x1xi1>
    %142 = arith.extui %141 : vector<32x1xi1> to vector<32x1xi32>
    %143 = arith.sitofp %142 : vector<32x1xi32> to vector<32x1xf32>
    %144 = vector.broadcast %143 : vector<32x1xf32> to vector<32x64xf32>
    %145 = arith.mulf %132, %144 : vector<32x64xf32>
    %c31_i32_45 = arith.constant 31 : i32
    %146 = tpu.dynamic_rotate %131 by %c31_i32_45 dim 0 : vector<32x64xf32>, i32 -> vector<32x64xf32>
    %c1_i32_46 = arith.constant 1 : i32
    %147 = vector.broadcast %c1_i32_46 : i32 to vector<32x1xi32>
    %148 = arith.addi %8, %147 : vector<32x1xi32>
    %c0_i32_47 = arith.constant 0 : i32
    %149 = vector.broadcast %c0_i32_47 : i32 to vector<32x1xi32>
    %150 = arith.cmpi sge, %148, %149 : vector<32x1xi32>
    %c1_i32_48 = arith.constant 1 : i32
    %151 = vector.broadcast %c1_i32_48 : i32 to vector<32x1xi32>
    %152 = arith.addi %8, %151 : vector<32x1xi32>
    %c16_i32_49 = arith.constant 16 : i32
    %153 = vector.broadcast %c16_i32_49 : i32 to vector<32x1xi32>
    %154 = arith.cmpi slt, %152, %153 : vector<32x1xi32>
    %155 = arith.andi %150, %154 : vector<32x1xi1>
    %156 = arith.extui %155 : vector<32x1xi1> to vector<32x1xi32>
    %157 = arith.sitofp %156 : vector<32x1xi32> to vector<32x1xf32>
    %158 = vector.broadcast %157 : vector<32x1xf32> to vector<32x64xf32>
    %159 = arith.mulf %146, %158 : vector<32x64xf32>
    %160 = tpu.concatenate %145, %131, %159 in 1 : vector<32x64xf32>, vector<32x64xf32>, vector<32x64xf32> -> vector<32x192xf32>
    %161 = arith.truncf %160 : vector<32x192xf32> to vector<32x192xbf16>
    %cst_50 = arith.constant dense<0.000000e+00> : vector<32x64xf32>
    %162 = tpu.matmul %161, %47, %cst_50 {dimension_numbers = #tpu.dot_dimension_numbers<[1], [0], [0], [1], [0, 0, 1, 1], [], []>} : vector<32x192xbf16>, vector<192x64xbf16>, vector<32x64xf32> -> vector<32x64xf32>
    %163 = vector.broadcast %37 : vector<1x64xf32> to vector<32x64xf32>
    %164 = arith.addf %162, %163 : vector<32x64xf32>
    %cst_51 = arith.constant 0.000000e+00 : f32
    %165 = vector.broadcast %cst_51 : f32 to vector<32x64xf32>
    %166 = arith.maximumf %164, %165 : vector<32x64xf32>
    %167 = vector.broadcast %13 : vector<1x64xf32> to vector<32x64xf32>
    %168 = arith.mulf %166, %167 : vector<32x64xf32>
    %cst_52 = arith.constant dense<0.000000e+00> : vector<32xf32>
    %169 = vector.multi_reduction <add>, %168, %cst_52 [1] : vector<32x64xf32> to vector<32xf32>
    %170 = vector.shape_cast %169 : vector<32xf32> to vector<32x1xf32>
    %cst_53 = arith.constant 3.200000e+01 : f32
    %171 = vector.broadcast %cst_53 : f32 to vector<32x1xf32>
    %172 = arith.divf %170, %171 : vector<32x1xf32>
    %173 = vector.broadcast %15 : vector<1x64xf32> to vector<32x64xf32>
    %174 = arith.mulf %166, %173 : vector<32x64xf32>
    %cst_54 = arith.constant dense<0.000000e+00> : vector<32xf32>
    %175 = vector.multi_reduction <add>, %174, %cst_54 [1] : vector<32x64xf32> to vector<32xf32>
    %176 = vector.shape_cast %175 : vector<32xf32> to vector<32x1xf32>
    %cst_55 = arith.constant 3.200000e+01 : f32
    %177 = vector.broadcast %cst_55 : f32 to vector<32x1xf32>
    %178 = arith.divf %176, %177 : vector<32x1xf32>
    %179 = vector.broadcast %172 : vector<32x1xf32> to vector<32x64xf32>
    %180 = vector.broadcast %13 : vector<1x64xf32> to vector<32x64xf32>
    %181 = arith.mulf %179, %180 : vector<32x64xf32>
    %182 = vector.broadcast %178 : vector<32x1xf32> to vector<32x64xf32>
    %183 = vector.broadcast %15 : vector<1x64xf32> to vector<32x64xf32>
    %184 = arith.mulf %182, %183 : vector<32x64xf32>
    %185 = arith.addf %181, %184 : vector<32x64xf32>
    %186 = arith.subf %166, %185 : vector<32x64xf32>
    %187 = arith.mulf %186, %186 : vector<32x64xf32>
    %188 = vector.broadcast %13 : vector<1x64xf32> to vector<32x64xf32>
    %189 = arith.mulf %187, %188 : vector<32x64xf32>
    %cst_56 = arith.constant dense<0.000000e+00> : vector<32xf32>
    %190 = vector.multi_reduction <add>, %189, %cst_56 [1] : vector<32x64xf32> to vector<32xf32>
    %191 = vector.shape_cast %190 : vector<32xf32> to vector<32x1xf32>
    %cst_57 = arith.constant 3.200000e+01 : f32
    %192 = vector.broadcast %cst_57 : f32 to vector<32x1xf32>
    %193 = arith.divf %191, %192 : vector<32x1xf32>
    %194 = arith.mulf %186, %186 : vector<32x64xf32>
    %195 = vector.broadcast %15 : vector<1x64xf32> to vector<32x64xf32>
    %196 = arith.mulf %194, %195 : vector<32x64xf32>
    %cst_58 = arith.constant dense<0.000000e+00> : vector<32xf32>
    %197 = vector.multi_reduction <add>, %196, %cst_58 [1] : vector<32x64xf32> to vector<32xf32>
    %198 = vector.shape_cast %197 : vector<32xf32> to vector<32x1xf32>
    %cst_59 = arith.constant 3.200000e+01 : f32
    %199 = vector.broadcast %cst_59 : f32 to vector<32x1xf32>
    %200 = arith.divf %198, %199 : vector<32x1xf32>
    %201 = vector.broadcast %193 : vector<32x1xf32> to vector<32x64xf32>
    %202 = vector.broadcast %13 : vector<1x64xf32> to vector<32x64xf32>
    %203 = arith.mulf %201, %202 : vector<32x64xf32>
    %204 = vector.broadcast %200 : vector<32x1xf32> to vector<32x64xf32>
    %205 = vector.broadcast %15 : vector<1x64xf32> to vector<32x64xf32>
    %206 = arith.mulf %204, %205 : vector<32x64xf32>
    %207 = arith.addf %203, %206 : vector<32x64xf32>
    %cst_60 = arith.constant 9.99999974E-6 : f32
    %208 = vector.broadcast %cst_60 : f32 to vector<32x64xf32>
    %209 = arith.addf %207, %208 : vector<32x64xf32>
    %210 = math.rsqrt %209 : vector<32x64xf32>
    %211 = arith.mulf %186, %210 : vector<32x64xf32>
    %212 = vector.broadcast %38 : vector<1x64xf32> to vector<32x64xf32>
    %213 = arith.mulf %211, %212 : vector<32x64xf32>
    %214 = vector.broadcast %39 : vector<1x64xf32> to vector<32x64xf32>
    %215 = arith.addf %213, %214 : vector<32x64xf32>
    %216 = vector.broadcast %40 : vector<1x64xf32> to vector<32x64xf32>
    %217 = arith.mulf %215, %216 : vector<32x64xf32>
    %cst_61 = arith.constant dense<0.000000e+00> : vector<32xf32>
    %218 = vector.multi_reduction <add>, %217, %cst_61 [1] : vector<32x64xf32> to vector<32xf32>
    %219 = vector.shape_cast %218 : vector<32xf32> to vector<32x1xf32>
    %220 = vector.broadcast %42 : vector<1x1xf32> to vector<32x1xf32>
    %221 = arith.addf %219, %220 : vector<32x1xf32>
    %222 = arith.mulf %221, %30 : vector<32x1xf32>
    %223 = vector.broadcast %41 : vector<1x64xf32> to vector<32x64xf32>
    %224 = arith.mulf %215, %223 : vector<32x64xf32>
    %cst_62 = arith.constant dense<0.000000e+00> : vector<32xf32>
    %225 = vector.multi_reduction <add>, %224, %cst_62 [1] : vector<32x64xf32> to vector<32xf32>
    %226 = vector.shape_cast %225 : vector<32xf32> to vector<32x1xf32>
    %227 = vector.broadcast %43 : vector<1x1xf32> to vector<32x1xf32>
    %228 = arith.addf %226, %227 : vector<32x1xf32>
    %229 = arith.mulf %228, %30 : vector<32x1xf32>
    %c0_63 = arith.constant 0 : index
    %c0_64 = arith.constant 0 : index
    %230 = vector.load %arg6[%c0_63, %c0_64] : memref<1x15xf32, #tpu.memory_space<vmem>>, vector<1x15xf32>
    %231 = vector.broadcast %229 : vector<32x1xf32> to vector<32x15xf32>
    %232 = vector.broadcast %230 : vector<1x15xf32> to vector<32x15xf32>
    %233 = arith.cmpf ogt, %231, %232 : vector<32x15xf32>
    %234 = arith.extui %233 : vector<32x15xi1> to vector<32x15xi32>
    %cst_65 = arith.constant dense<0> : vector<32xi32>
    %235 = vector.multi_reduction <add>, %234, %cst_65 [1] : vector<32x15xi32> to vector<32xi32>
    %236 = vector.shape_cast %235 : vector<32xi32> to vector<32x1xi32>
    %237 = tpu.iota {dimensions = array<i32: 1>} : vector<32x16xi32>
    %238 = vector.broadcast %236 : vector<32x1xi32> to vector<32x16xi32>
    %239 = arith.cmpi eq, %238, %237 : vector<32x16xi32>
    %240 = arith.extui %239 : vector<32x16xi1> to vector<32x16xi32>
    %241 = arith.sitofp %240 : vector<32x16xi32> to vector<32x16xf32>
    %c0_66 = arith.constant 0 : index
    %c0_67 = arith.constant 0 : index
    %242 = vector.load %arg7[%c0_66, %c0_67] : memref<16x32xf32, #tpu.memory_space<vmem>>, vector<16x32xf32>
    %cst_68 = arith.constant dense<0.000000e+00> : vector<32x32xf32>
    %243 = tpu.matmul %241, %242, %cst_68 {dimension_numbers = #tpu.dot_dimension_numbers<[1], [0], [0], [1], [0, 0, 1, 1], [], []>} : vector<32x16xf32>, vector<16x32xf32>, vector<32x32xf32> -> vector<32x32xf32>
    %244 = arith.addf %31, %243 : vector<32x32xf32>
    %c0_69 = arith.constant 0 : index
    %c0_70 = arith.constant 0 : index
    %245 = vector.load %arg8[%c0_69, %c0_70] : memref<32x32xf32, #tpu.memory_space<vmem>>, vector<32x32xf32>
    tpu.vector_store %arg8[%c0_69, %c0_70], %244 {strides = array<i32>} : memref<32x32xf32, #tpu.memory_space<vmem>>, vector<32x32xf32>,
    %246 = tpu.concatenate %222, %229 in 1 : vector<32x1xf32>, vector<32x1xf32> -> vector<32x2xf32>
    %c0_71 = arith.constant 0 : index
    %c0_72 = arith.constant 0 : index
    %247 = vector.load %arg9[%c0_71, %c0_72] : memref<32x2xf32, #tpu.memory_space<vmem>>, vector<32x2xf32>
    tpu.vector_store %arg9[%c0_71, %c0_72], %246 {strides = array<i32>} : memref<32x2xf32, #tpu.memory_space<vmem>>, vector<32x2xf32>,
    return
  }
  func.func @transform_0(%arg0: i32, %arg1: memref<2xi32, #tpu.memory_space<smem>>) -> (i32, i32) {
    %c0_i32 = arith.constant 0 : i32
    %c0_i32_0 = arith.constant 0 : i32
    %c0_i32_1 = arith.constant 0 : i32
    return %c0_i32, %c0_i32_0 : i32, i32
  }
  func.func @transform_1(%arg0: i32, %arg1: memref<2xi32, #tpu.memory_space<smem>>) -> (i32, i32) {
    %c0_i32 = arith.constant 0 : i32
    %c0_i32_0 = arith.constant 0 : i32
    %c0_i32_1 = arith.constant 0 : i32
    return %c0_i32, %c0_i32_0 : i32, i32
  }
  func.func @transform_2(%arg0: i32, %arg1: memref<2xi32, #tpu.memory_space<smem>>) -> (i32, i32) {
    %c0_i32 = arith.constant 0 : i32
    %c0_i32_0 = arith.constant 0 : i32
    %c0_i32_1 = arith.constant 0 : i32
    return %c0_i32, %c0_i32_0 : i32, i32
  }
  func.func @transform_3(%arg0: i32, %arg1: memref<2xi32, #tpu.memory_space<smem>>) -> (i32, i32) {
    %c0_i32 = arith.constant 0 : i32
    %c0_i32_0 = arith.constant 0 : i32
    %c0_i32_1 = arith.constant 0 : i32
    return %c0_i32, %c0_i32_0 : i32, i32
  }
  func.func @transform_4(%arg0: i32, %arg1: memref<2xi32, #tpu.memory_space<smem>>) -> (i32, i32) {
    %c0_i32 = arith.constant 0 : i32
    %c0_i32_0 = arith.constant 0 : i32
    %c0_i32_1 = arith.constant 0 : i32
    return %c0_i32, %c0_i32_0 : i32, i32
  }
  func.func @transform_5(%arg0: i32, %arg1: memref<2xi32, #tpu.memory_space<smem>>) -> (i32, i32) {
    %c0_i32 = arith.constant 0 : i32
    %c0_i32_0 = arith.constant 0 : i32
    %c0_i32_1 = arith.constant 0 : i32
    return %c0_i32, %c0_i32_0 : i32, i32
  }
  func.func @transform_6(%arg0: i32, %arg1: memref<2xi32, #tpu.memory_space<smem>>) -> (i32, i32) {
    %c0_i32 = arith.constant 0 : i32
    %c0_i32_0 = arith.constant 0 : i32
    %c0_i32_1 = arith.constant 0 : i32
    return %c0_i32, %c0_i32_0 : i32, i32
  }
  func.func @transform_7(%arg0: i32, %arg1: memref<2xi32, #tpu.memory_space<smem>>) -> (i32, i32) {
    %c0_i32 = arith.constant 0 : i32
    %c0_i32_0 = arith.constant 0 : i32
    %c0_i32_1 = arith.constant 0 : i32
    return %c0_i32, %c0_i32_0 : i32, i32
  }
}

</mosaic_0001>

<llo_original>
// kernel: custom-call.8
$region0: #{custom-call.8}
  %s0 = inlined_call_operand.vmem [shape: u32[2,16], index: 0, kind: output, shape index: {}]

// kernel: squeeze.18
$region0: #{squeeze.18}
  %s0 = inlined_call_operand.vmem [shape: s32[32], index: 0, kind: input, shape index: {}]
  %s1 = inlined_call_operand.vmem [shape: s32[2,16], index: 1, kind: output, shape index: {}]
  $region1: #{squeeze.18} parent=0
    #allocation0 [shape = 'u8[4096]{0}', space=vmem, size = 0x1000, scoped, tag = 'scoped mem for output reshape']
    #allocation1 [shape = 'u8[4096]{0}', space=vmem, size = 0x1000, scoped, tag = 'scoped mem for input reshape']
    %s3 = sshllo.u32 0, 1
    %v4 = vld [vmem:[%s0] sm:%s3]
    %5 = vst [vmem:[#allocation1] sm:%s3] %v4
    %v6 = vld [vmem:[#allocation1] sm:$0x1]
    %vm7 = vcmask 130048
    %8 = vst.msk [vmem:[#allocation0] sm:$0x1] %vm7, %v6
    %v9 = vld [vmem:[#allocation1] sm:$0x1]
    %10 = vrot.lane.b32.xlu0 %v9, 112
    %v11 = vpop.permute.xlu0 %10
    %vm12 = vcmask 130048
    %s13 = scalar_lea.vmem [#allocation0], 1
    %14 = vst.msk [vmem:[%s13] sm:$0x1] %vm12, %v11
    %s16 = sshllo.u32 0, 2
    %v18 = vld [vmem:[#allocation0] sm:%s16]
    %s19 = sshllo.u32 0, 2
    %20 = vst [vmem:[%s1] sm:%s19] %v18

// kernel: custom-call.10
$region0: #{custom-call.10}
  %s0 = inlined_call_operand.vmem [shape: u32[2,48], index: 0, kind: output, shape index: {}]

// kernel: squeeze.19
$region0: #{squeeze.19}
  %s0 = inlined_call_operand.vmem [shape: s32[96], index: 0, kind: input, shape index: {}]
  %s1 = inlined_call_operand.vmem [shape: s32[2,48], index: 1, kind: output, shape index: {}]
  $region1: #{squeeze.19} parent=0
    #allocation0 [shape = 'u8[4096]{0}', space=vmem, size = 0x1000, scoped, tag = 'scoped mem for output reshape']
    #allocation1 [shape = 'u8[4096]{0}', space=vmem, size = 0x1000, scoped, tag = 'scoped mem for input reshape']
    %s3 = sshllo.u32 0, 1
    %v4 = vld [vmem:[%s0] sm:%s3]
    %5 = vst [vmem:[#allocation1] sm:%s3] %v4
    %v6 = vld [vmem:[#allocation1] sm:$0x1]
    %vm7 = vcmask 392192
    %8 = vst.msk [vmem:[#allocation0] sm:$0x1] %vm7, %v6
    %v9 = vld [vmem:[#allocation1] sm:$0x1]
    %10 = vrot.lane.b32.xlu0 %v9, 80
    %v11 = vpop.permute.xlu0 %10
    %vm12 = vcmask 392192
    %s13 = scalar_lea.vmem [#allocation0], 1
    %14 = vst.msk [vmem:[%s13] sm:$0x1] %vm12, %v11
    %s16 = sshllo.u32 0, 2
    %v18 = vld [vmem:[#allocation0] sm:%s16]
    %s19 = sshllo.u32 0, 2
    %20 = vst [vmem:[%s1] sm:%s19] %v18

// kernel: _variance_adaptor_forward.1
$region0: #{_variance_adaptor_forward.1}
  #allocation0 [shape = 'u32[]', space=smem, size = 0x4, offset = 0x4, fixed_abs, tag = 'smem constant byte address 0x4 - core index']
  #allocation1 [shape = 'u32[144,128]{1,0:T(1,128)}', space=vmem, size = 0x12000, scoped, tag = 'internal scratch']
  #allocation2 [shape = 's32[1]{0}', space=sflag, size = 0x4, scoped, tag = 'scoped memory for _variance_adaptor_forward.1']
  #allocation3 [shape = 'u8[512]{0}', space=smem, size = 0x200, scoped, tag = 'prefetched SMEM operand 0']
  %s0 = inlined_call_operand.vmem [shape: s32[2], index: 0, kind: input, shape index: {}]
  %s1 = inlined_call_operand.vmem [shape: f32[32,32], index: 1, kind: input, shape index: {}]
  %s2 = inlined_call_operand.vmem [shape: f32[96,64], index: 2, kind: input, shape index: {}]
  %s3 = inlined_call_operand.vmem [shape: f32[192,64], index: 3, kind: input, shape index: {}]
  %s4 = inlined_call_operand.vmem [shape: f32[9,64], index: 4, kind: input, shape index: {}]
  %s5 = inlined_call_operand.vmem [shape: f32[1,15], index: 5, kind: input, shape index: {}]
  %s6 = inlined_call_operand.vmem [shape: f32[16,32], index: 6, kind: input, shape index: {}]
  %s7 = inlined_call_operand.vmem [shape: f32[32,32], index: 7, kind: output, shape index: {0}]
  %s8 = inlined_call_operand.vmem [shape: f32[32,2], index: 8, kind: output, shape index: {1}]
  %9 = xla_tuple %s7, %s8
  %s10 = sld [smem:[#allocation0]]
  $region42: #{_variance_adaptor_forward.1} parent=0
    _
  %s12 = ssub.s32 1, %s10
  %s13 = scalar_select 0, %s12, %s10
  %s14 = sshll.u32 %s0, 4
  %s15 = int_to_ptr.vmem [resolvable:$true] %s14
  %17 = dma.vmem_to_smem %s15, 16, [#allocation3], [#allocation2]
  %18 = dma.done [#allocation2], 16
  %19 = sfence
  // Predicated region
  $region2: #{_variance_adaptor_forward.1} parent=0 // pred_check
    _
  $region3: #{_variance_adaptor_forward.1} parent=0 // pred_check_branch
    %21 = sbr.rel (0) target = $region5
  $region4: #{_variance_adaptor_forward.1} parent=0 // pred_region
    _
  $region5: #{_variance_adaptor_forward.1} parent=0 // pred_fallthru
    _
  // Predicated region
  $region6: #{_variance_adaptor_forward.1} parent=0 // pred_check
    _
  $region7: #{_variance_adaptor_forward.1} parent=0 // pred_check_branch
    %23 = sbr.rel (0) target = $region9
  $region8: #{_variance_adaptor_forward.1} parent=0 // pred_region
    _
  $region9: #{_variance_adaptor_forward.1} parent=0 // pred_fallthru
    _
  // Predicated region
  $region10: #{_variance_adaptor_forward.1} parent=0 // pred_check
    _
  $region11: #{_variance_adaptor_forward.1} parent=0 // pred_check_branch
    %25 = sbr.rel (0) target = $region13
  $region12: #{_variance_adaptor_forward.1} parent=0 // pred_region
    _
  $region13: #{_variance_adaptor_forward.1} parent=0 // pred_fallthru
    _
  // Predicated region
  $region14: #{_variance_adaptor_forward.1} parent=0 // pred_check
    _
  $region15: #{_variance_adaptor_forward.1} parent=0 // pred_check_branch
    %27 = sbr.rel (0) target = $region17
  $region16: #{_variance_adaptor_forward.1} parent=0 // pred_region
    _
  $region17: #{_variance_adaptor_forward.1} parent=0 // pred_fallthru
    _
  // Predicated region
  $region18: #{_variance_adaptor_forward.1} parent=0 // pred_check
    _
  $region19: #{_variance_adaptor_forward.1} parent=0 // pred_check_branch
    %29 = sbr.rel (0) target = $region21
  $region20: #{_variance_adaptor_forward.1} parent=0 // pred_region
    _
  $region21: #{_variance_adaptor_forward.1} parent=0 // pred_fallthru
    _
  // Predicated region
  $region22: #{_variance_adaptor_forward.1} parent=0 // pred_check
    _
  $region23: #{_variance_adaptor_forward.1} parent=0 // pred_check_branch
    %31 = sbr.rel (0) target = $region25
  $region24: #{_variance_adaptor_forward.1} parent=0 // pred_region
    _
  $region25: #{_variance_adaptor_forward.1} parent=0 // pred_fallthru
    _
  %v33 = vlaneseq
  %v34 = vshrl.u32 %v33, 7
  %v35 = vadd.s32 %v34, 8
  %v36 = vadd.s32 %v34, 16
  %v37 = vadd.s32 %v34, 24
  %vm38 = vcmp.ge.s32.totalorder %v34, 16
  %vm39 = vcmp.ge.s32.totalorder %v35, 16
  %vm40 = vcmp.ge.s32.totalorder %v36, 16
  %vm41 = vcmp.ge.s32.totalorder %v37, 16
  %v42 = vsel %vm38, 1, 0
  %v43 = vsel %vm39, 1, 0
  %v44 = vsel %vm40, 1, 0
  %v45 = vsel %vm41, 1, 0
  %v46 = vmul.u32 %v42, 16
  %v47 = vmul.u32 %v43, 16
  %v48 = vmul.u32 %v44, 16
  %v49 = vmul.u32 %v45, 16
  %v50 = vsub.s32 %v34, %v46
  %v51 = vsub.s32 %v35, %v47
  %v52 = vsub.s32 %v36, %v48
  %v53 = vsub.s32 %v37, %v49
  %v54 = vlaneseq
  %v55 = vand.u32 %v54, 127
  %vm56 = vcmp.lt.s32.totalorder %v55, 32
  %v57 = vsel %vm56, 1, 0
  %v58 = vcvt.s32.f32 %v57
  %v59 = vsub.f32 1.0, %v58
  %vm60 = vcmp.eq.s32.totalorder %v42, 0
  %vm61 = vcmp.eq.s32.totalorder %v43, 0
  %vm62 = vcmp.eq.s32.totalorder %v44, 0
  %vm63 = vcmp.eq.s32.totalorder %v45, 0
  %s64 = sld [smem:[#allocation3]]
  %v65 = vstv %s64
  %vm66 = vcmp.lt.s32.totalorder %v50, %v65
  %vm67 = vcmp.lt.s32.totalorder %v51, %v65
  %vm68 = vcmp.lt.s32.totalorder %v52, %v65
  %vm69 = vcmp.lt.s32.totalorder %v53, %v65
  %vm70 = vmand %vm60, %vm66
  %vm71 = vmand %vm61, %vm67
  %vm72 = vmand %vm62, %vm68
  %vm73 = vmand %vm63, %vm69
  %vm74 = vcmp.eq.s32.totalorder %v42, 1
  %vm75 = vcmp.eq.s32.totalorder %v43, 1
  %vm76 = vcmp.eq.s32.totalorder %v44, 1
  %vm77 = vcmp.eq.s32.totalorder %v45, 1
  %s78 = sld [smem:[#allocation3 + $0x1]]
  %v79 = vstv %s78
  %vm80 = vcmp.lt.s32.totalorder %v50, %v79
  %vm81 = vcmp.lt.s32.totalorder %v51, %v79
  %vm82 = vcmp.lt.s32.totalorder %v52, %v79
  %vm83 = vcmp.lt.s32.totalorder %v53, %v79
  %vm84 = vmand %vm74, %vm80
  %vm85 = vmand %vm75, %vm81
  %vm86 = vmand %vm76, %vm82
  %vm87 = vmand %vm77, %vm83
  %vm88 = vmor %vm70, %vm84
  %vm89 = vmor %vm71, %vm85
  %vm90 = vmor %vm72, %vm86
  %vm91 = vmor %vm73, %vm87
  %v92 = vsel %vm88, 1, 0
  %v93 = vsel %vm89, 1, 0
  %v94 = vsel %vm90, 1, 0
  %v95 = vsel %vm91, 1, 0
  %v96 = vcvt.s32.f32 %v92
  %v97 = vcvt.s32.f32 %v93
  %v98 = vcvt.s32.f32 %v94
  %v99 = vcvt.s32.f32 %v95
  %v100 = vld [vmem:[%s1] sm:$0xff]
  %v101 = vld [vmem:[%s1 + $0x8] sm:$0xff]
  %v102 = vld [vmem:[%s1 + $0x10] sm:$0xff]
  %v103 = vld [vmem:[%s1 + $0x18] sm:$0xff]
  %v104 = vmul.f32 %v100, %v96
  %v105 = vmul.f32 %v101, %v97
  %v106 = vmul.f32 %v102, %v98
  %v107 = vmul.f32 %v103, %v99
  %v108 = vld [vmem:[%s4] sm:$0x1]
  %v109 = vld [vmem:[%s4 + $0x1] sm:$0x1]
  %v110 = vld [vmem:[%s4 + $0x2] sm:$0x1]
  %v111 = vld [vmem:[%s4 + $0x3] sm:$0x1]
  %v112 = vld [vmem:[%s4 + $0x4] sm:$0x1]
  %v113 = vld [vmem:[%s4 + $0x5] sm:$0x1]
  %v114 = vld [vmem:[%s4 + $0x6] sm:$0x1]
  %v115 = vld [vmem:[%s4 + $0x7] sm:$0x1]
  %v116 = vld [vmem:[%s4 + $0x8] sm:$0x1]
  %v117 = vld [vmem:[%s2] sm:$0xff]
  %v118 = vld [vmem:[%s2 + $0x8] sm:$0xff]
  %v119 = vld [vmem:[%s2 + $0x10] sm:$0xff]
  %v120 = vld [vmem:[%s2 + $0x18] sm:$0xff]
  %v121 = vld [vmem:[%s2 + $0x20] sm:$0xff]
  %v122 = vld [vmem:[%s2 + $0x28] sm:$0xff]
  %v123 = vld [vmem:[%s2 + $0x30] sm:$0xff]
  %v124 = vld [vmem:[%s2 + $0x38] sm:$0xff]
  %v125 = vld [vmem:[%s2 + $0x40] sm:$0xff]
  %v126 = vld [vmem:[%s2 + $0x48] sm:$0xff]
  %v127 = vld [vmem:[%s2 + $0x50] sm:$0xff]
  %v128 = vld [vmem:[%s2 + $0x58] sm:$0xff]
  %v129 = vpack.c.bf16 %v118, %v117
  %v130 = vpack.c.bf16 %v120, %v119
  %v131 = vpack.c.bf16 %v122, %v121
  %v132 = vpack.c.bf16 %v124, %v123
  %v133 = vpack.c.bf16 %v126, %v125
  %v134 = vpack.c.bf16 %v128, %v127
  %v135 = vld [vmem:[%s3] sm:$0xff]
  %v136 = vld [vmem:[%s3 + $0x8] sm:$0xff]
  %v137 = vld [vmem:[%s3 + $0x10] sm:$0xff]
  %v138 = vld [vmem:[%s3 + $0x18] sm:$0xff]
  %v139 = vld [vmem:[%s3 + $0x20] sm:$0xff]
  %v140 = vld [vmem:[%s3 + $0x28] sm:$0xff]
  %v141 = vld [vmem:[%s3 + $0x30] sm:$0xff]
  %v142 = vld [vmem:[%s3 + $0x38] sm:$0xff]
  %v143 = vld [vmem:[%s3 + $0x40] sm:$0xff]
  %v144 = vld [vmem:[%s3 + $0x48] sm:$0xff]
  %v145 = vld [vmem:[%s3 + $0x50] sm:$0xff]
  %v146 = vld [vmem:[%s3 + $0x58] sm:$0xff]
  %v147 = vld [vmem:[%s3 + $0x60] sm:$0xff]
  %v148 = vld [vmem:[%s3 + $0x68] sm:$0xff]
  %v149 = vld [vmem:[%s3 + $0x70] sm:$0xff]
  %v150 = vld [vmem:[%s3 + $0x78] sm:$0xff]
  %v151 = vld [vmem:[%s3 + $0x80] sm:$0xff]
  %v152 = vld [vmem:[%s3 + $0x88] sm:$0xff]
  %v153 = vld [vmem:[%s3 + $0x90] sm:$0xff]
  %v154 = vld [vmem:[%s3 + $0x98] sm:$0xff]
  %v155 = vld [vmem:[%s3 + $0xa0] sm:$0xff]
  %v156 = vld [vmem:[%s3 + $0xa8] sm:$0xff]
  %v157 = vld [vmem:[%s3 + $0xb0] sm:$0xff]
  %v158 = vld [vmem:[%s3 + $0xb8] sm:$0xff]
  %v159 = vpack.c.bf16 %v136, %v135
  %v160 = vpack.c.bf16 %v138, %v137
  %v161 = vpack.c.bf16 %v140, %v139
  %v162 = vpack.c.bf16 %v142, %v141
  %v163 = vpack.c.bf16 %v144, %v143
  %v164 = vpack.c.bf16 %v146, %v145
  %v165 = vpack.c.bf16 %v148, %v147
  %v166 = vpack.c.bf16 %v150, %v149
  %v167 = vpack.c.bf16 %v152, %v151
  %v168 = vpack.c.bf16 %v154, %v153
  %v169 = vpack.c.bf16 %v156, %v155
  %v170 = vpack.c.bf16 %v158, %v157
  %v171 = vrot.slane %v104, 7
  %v172 = vrot.slane %v105, 7
  %v173 = vrot.slane %v106, 7
  %v174 = vrot.slane %v107, 7
  %vm175 = vcmp.lt.s32.totalorder %v34, 1
  %v176 = vsel %vm175, %v173, %v174
  %v177 = vsel %vm175, %v172, %v173
  %v178 = vsel %vm175, %v171, %v172
  %v179 = vsel %vm175, %v174, %v171
  %v180 = vadd.s32 %v50, 4294967295
  %v181 = vadd.s32 %v51, 4294967295
  %v182 = vadd.s32 %v52, 4294967295
  %v183 = vadd.s32 %v53, 4294967295
  %vm184 = vcmp.ge.s32.totalorder %v180, 0
  %vm185 = vcmp.ge.s32.totalorder %v181, 0
  %vm186 = vcmp.ge.s32.totalorder %v182, 0
  %vm187 = vcmp.ge.s32.totalorder %v183, 0
  %vm188 = vcmp.lt.s32.totalorder %v180, 16
  %vm189 = vcmp.lt.s32.totalorder %v181, 16
  %vm190 = vcmp.lt.s32.totalorder %v182, 16
  %vm191 = vcmp.lt.s32.totalorder %v183, 16
  %vm192 = vmand %vm184, %vm188
  %vm193 = vmand %vm185, %vm189
  %vm194 = vmand %vm186, %vm190
  %vm195 = vmand %vm187, %vm191
  %v196 = vsel %vm192, 1, 0
  %v197 = vsel %vm193, 1, 0
  %v198 = vsel %vm194, 1, 0
  %v199 = vsel %vm195, 1, 0
  %v200 = vcvt.s32.f32 %v196
  %v201 = vcvt.s32.f32 %v197
  %v202 = vcvt.s32.f32 %v198
  %v203 = vcvt.s32.f32 %v199
  %v204 = vmul.f32 %v179, %v200
  %v205 = vmul.f32 %v178, %v201
  %v206 = vmul.f32 %v177, %v202
  %v207 = vmul.f32 %v176, %v203
  %v208 = vrot.slane %v104, 1
  %v209 = vrot.slane %v105, 1
  %v210 = vrot.slane %v106, 1
  %v211 = vrot.slane %v107, 1
  %vm212 = vcmp.lt.s32.totalorder %v34, 7
  %v213 = vsel %vm212, %v210, %v211
  %v214 = vsel %vm212, %v209, %v210
  %v215 = vsel %vm212, %v208, %v209
  %v216 = vsel %vm212, %v211, %v208
  %v217 = vadd.s32 %v50, 1
  %v218 = vadd.s32 %v51, 1
  %v219 = vadd.s32 %v52, 1
  %v220 = vadd.s32 %v53, 1
  %vm221 = vcmp.ge.s32.totalorder %v217, 0
  %vm222 = vcmp.ge.s32.totalorder %v218, 0
  %vm223 = vcmp.ge.s32.totalorder %v219, 0
  %vm224 = vcmp.ge.s32.totalorder %v220, 0
  %vm225 = vcmp.lt.s32.totalorder %v217, 16
  %vm226 = vcmp.lt.s32.totalorder %v218, 16
  %vm227 = vcmp.lt.s32.totalorder %v219, 16
  %vm228 = vcmp.lt.s32.totalorder %v220, 16
  %vm229 = vmand %vm221, %vm225
  %vm230 = vmand %vm222, %vm226
  %vm231 = vmand %vm223, %vm227
  %vm232 = vmand %vm224, %vm228
  %v233 = vsel %vm229, 1, 0
  %v234 = vsel %vm230, 1, 0
  %v235 = vsel %vm231, 1, 0
  %v236 = vsel %vm232, 1, 0
  %v237 = vcvt.s32.f32 %v233
  %v238 = vcvt.s32.f32 %v234
  %v239 = vcvt.s32.f32 %v235
  %v240 = vcvt.s32.f32 %v236
  %v241 = vmul.f32 %v215, %v237
  %v242 = vmul.f32 %v214, %v238
  %v243 = vmul.f32 %v213, %v239
  %v244 = vmul.f32 %v216, %v240
  %249 = vrot.lane.b32.xlu0 %v104, 32
  %v250 = vpop.permute.xlu0 %249
  %251 = vrot.lane.b32.xlu0 %v105, 32
  %v252 = vpop.permute.xlu0 %251
  %253 = vrot.lane.b32.xlu0 %v106, 32
  %v254 = vpop.permute.xlu0 %253
  %255 = vrot.lane.b32.xlu0 %v107, 32
  %v256 = vpop.permute.xlu0 %255
  %265 = vrot.lane.b32.xlu0 %v241, 64
  %v266 = vpop.permute.xlu0 %265
  %267 = vrot.lane.b32.xlu0 %v242, 64
  %v268 = vpop.permute.xlu0 %267
  %269 = vrot.lane.b32.xlu0 %v243, 64
  %v270 = vpop.permute.xlu0 %269
  %271 = vrot.lane.b32.xlu0 %v244, 64
  %v272 = vpop.permute.xlu0 %271
  %vm277 = vcmask 261120
  %v278 = vsel %vm277, %v204, %v250
  %v279 = vsel %vm277, %v205, %v252
  %v280 = vsel %vm277, %v206, %v254
  %v281 = vsel %vm277, %v207, %v256
  %vm282 = vcmask 523264
  %v283 = vsel %vm282, %v278, %v266
  %v284 = vsel %vm282, %v279, %v268
  %v285 = vsel %vm282, %v280, %v270
  %v286 = vsel %vm282, %v281, %v272
  %v287 = vpack.c.bf16 %v284, %v283
  %v288 = vpack.c.bf16 %v286, %v285
  %v289 = vlaneseq
  %v290 = vshrl.u32 %v289, 7
  %v291 = vsub.s32 0, %v290
  %v292 = vrot.slane %v108, %v291
  %vm293 = vcmask 785408
  %v295 = vsel %vm293, %v287, 0
  %v298 = vsel %vm293, %v288, 0
  %300 = vmatprep.subr.bf16.mxu0 0
  %301 = vmatpush1.bf16.msra.mxu0 %v129
  %302 = vmatprep.subr.bf16.mxu0 0
  %303 = vmatpush1.bf16.msra.mxu0 %v130
  %304 = vmatprep.subr.bf16.mxu0 0
  %305 = vmatpush1.bf16.msra.mxu0 %v131
  %306 = vmatprep.subr.bf16.mxu0 0
  %307 = vmatpush1.bf16.msra.mxu0 %v132
  %308 = vmatprep.subr.bf16.mxu0 0
  %309 = vmatpush1.bf16.msra.mxu0 %v133
  %310 = vmatprep.subr.bf16.mxu0 0
  %311 = vmatpush1.bf16.msra.mxu0 %v134
  %312 = vmatprep.subr.bf16.mxu0 0
  %313 = vmatpush1.bf16.msra.mxu0 0
  %314 = vmatprep.subr.bf16.mxu0 0
  %315 = vmatpush1.bf16.msra.mxu0 0
  %316 = vmatprep.subr.bf16.mxu0 0
  %317 = vmatpush1.bf16.msra.mxu0 0
  %318 = vmatprep.subr.bf16.mxu0 0
  %319 = vmatpush1.bf16.msra.mxu0 0
  %320 = vmatprep.subr.bf16.mxu0 0
  %321 = vmatpush1.bf16.msra.mxu0 0
  %322 = vmatprep.subr.bf16.mxu0 0
  %323 = vmatpush1.bf16.msra.mxu0 0
  %324 = vmatprep.subr.bf16.mxu0 0
  %325 = vmatpush1.bf16.msra.mxu0 0
  %326 = vmatprep.subr.bf16.mxu0 0
  %327 = vmatpush1.bf16.msra.mxu0 0
  %328 = vmatprep.subr.bf16.mxu0 0
  %329 = vmatpush1.bf16.msra.mxu0 0
  %330 = vmatprep.subr.bf16.mxu0 0
  %331 = vmatpush1.bf16.msra.mxu0 0
  %332 = vmatprep.mubr.bf16.mxu0 0
  %333 = vmatmul.mubr.bf16.gmra.mrb[0].mxu0 %v295
  %v334 = vpop.f32.mrb[0].mxu0
  %v335 = vadd.f32 %v292, %v334
  %v336 = vpop.f32.mrb[0].mxu0
  %v337 = vpop.f32.mrb[0].mxu0
  %v338 = vadd.f32 %v292, %v337
  %v339 = vpop.f32.mrb[0].mxu0
  %340 = vmatprep.mubr.bf16.mxu0 0
  %341 = vmatmul.mubr.bf16.gmra.mrb[0].mxu0 %v298
  %v342 = vpop.f32.mrb[0].mxu0
  %v343 = vadd.f32 %v292, %v342
  %v344 = vpop.f32.mrb[0].mxu0
  %v345 = vpop.f32.mrb[0].mxu0
  %v346 = vadd.f32 %v292, %v345
  %v347 = vpop.f32.mrb[0].mxu0
  %348 = vdwg.mxu0
  %v349 = vmax.f32 %v335, 0.0
  %v350 = vmax.f32 %v338, 0.0
  %v351 = vmax.f32 %v343, 0.0
  %v352 = vmax.f32 %v346, 0.0
  %v353 = vmul.f32 %v349, %v58
  %v354 = vmul.f32 %v350, %v58
  %v355 = vmul.f32 %v351, %v58
  %v356 = vmul.f32 %v352, %v58
  %v357 = vsel %vm282, %v353, 0.0
  %358 = vadd.xlane.f32.xlu0 %v357
  %v359 = vpop.xlane.xlu0 %358
  %v360 = vsel %vm282, %v354, 0.0
  %361 = vadd.xlane.f32.xlu0 %v360
  %v362 = vpop.xlane.xlu0 %361
  %v363 = vsel %vm282, %v355, 0.0
  %364 = vadd.xlane.f32.xlu0 %v363
  %v365 = vpop.xlane.xlu0 %364
  %v366 = vsel %vm282, %v356, 0.0
  %367 = vadd.xlane.f32.xlu0 %v366
  %v368 = vpop.xlane.xlu0 %367
  %v369 = vrcp.pop 32.0
  %v370 = vmul.f32 %v359, %v369
  %v371 = vmul.f32 %v362, %v369
  %v372 = vmul.f32 %v365, %v369
  %v373 = vmul.f32 %v368, %v369
  %v374 = vmul.f32 %v349, %v59
  %v375 = vmul.f32 %v350, %v59
  %v376 = vmul.f32 %v351, %v59
  %v377 = vmul.f32 %v352, %v59
  %v378 = vsel %vm282, %v374, 0.0
  %379 = vadd.xlane.f32.xlu0 %v378
  %v380 = vpop.xlane.xlu0 %379
  %v381 = vsel %vm282, %v375, 0.0
  %382 = vadd.xlane.f32.xlu0 %v381
  %v383 = vpop.xlane.xlu0 %382
  %v384 = vsel %vm282, %v376, 0.0
  %385 = vadd.xlane.f32.xlu0 %v384
  %v386 = vpop.xlane.xlu0 %385
  %v387 = vsel %vm282, %v377, 0.0
  %388 = vadd.xlane.f32.xlu0 %v387
  %v389 = vpop.xlane.xlu0 %388
  %v390 = vmul.f32 %v380, %v369
  %v391 = vmul.f32 %v383, %v369
  %v392 = vmul.f32 %v386, %v369
  %v393 = vmul.f32 %v389, %v369
  %v394 = vmul.f32 %v370, %v58
  %v395 = vmul.f32 %v371, %v58
  %v396 = vmul.f32 %v372, %v58
  %v397 = vmul.f32 %v373, %v58
  %v398 = vmul.f32 %v390, %v59
  %v399 = vmul.f32 %v391, %v59
  %v400 = vmul.f32 %v392, %v59
  %v401 = vmul.f32 %v393, %v59
  %v402 = vadd.f32 %v394, %v398
  %v403 = vadd.f32 %v395, %v399
  %v404 = vadd.f32 %v396, %v400
  %v405 = vadd.f32 %v397, %v401
  %v406 = vsub.f32 %v349, %v402
  %v407 = vsub.f32 %v350, %v403
  %v408 = vsub.f32 %v351, %v404
  %v409 = vsub.f32 %v352, %v405
  %v410 = vmul.f32 %v406, %v406
  %v411 = vmul.f32 %v407, %v407
  %v412 = vmul.f32 %v408, %v408
  %v413 = vmul.f32 %v409, %v409
  %v414 = vmul.f32 %v410, %v58
  %v415 = vmul.f32 %v411, %v58
  %v416 = vmul.f32 %v412, %v58
  %v417 = vmul.f32 %v413, %v58
  %v418 = vsel %vm282, %v414, 0.0
  %419 = vadd.xlane.f32.xlu0 %v418
  %v420 = vpop.xlane.xlu0 %419
  %v421 = vsel %vm282, %v415, 0.0
  %422 = vadd.xlane.f32.xlu0 %v421
  %v423 = vpop.xlane.xlu0 %422
  %v424 = vsel %vm282, %v416, 0.0
  %425 = vadd.xlane.f32.xlu0 %v424
  %v426 = vpop.xlane.xlu0 %425
  %v427 = vsel %vm282, %v417, 0.0
  %428 = vadd.xlane.f32.xlu0 %v427
  %v429 = vpop.xlane.xlu0 %428
  %v430 = vmul.f32 %v420, %v369
  %v431 = vmul.f32 %v423, %v369
  %v432 = vmul.f32 %v426, %v369
  %v433 = vmul.f32 %v429, %v369
  %v434 = vmul.f32 %v410, %v59
  %v435 = vmul.f32 %v411, %v59
  %v436 = vmul.f32 %v412, %v59
  %v437 = vmul.f32 %v413, %v59
  %v438 = vsel %vm282, %v434, 0.0
  %439 = vadd.xlane.f32.xlu0 %v438
  %v440 = vpop.xlane.xlu0 %439
  %v441 = vsel %vm282, %v435, 0.0
  %442 = vadd.xlane.f32.xlu0 %v441
  %v443 = vpop.xlane.xlu0 %442
  %v444 = vsel %vm282, %v436, 0.0
  %445 = vadd.xlane.f32.xlu0 %v444
  %v446 = vpop.xlane.xlu0 %445
  %v447 = vsel %vm282, %v437, 0.0
  %448 = vadd.xlane.f32.xlu0 %v447
  %v449 = vpop.xlane.xlu0 %448
  %v450 = vmul.f32 %v440, %v369
  %v451 = vmul.f32 %v443, %v369
  %v452 = vmul.f32 %v446, %v369
  %v453 = vmul.f32 %v449, %v369
  %v454 = vmul.f32 %v430, %v58
  %v455 = vmul.f32 %v431, %v58
  %v456 = vmul.f32 %v432, %v58
  %v457 = vmul.f32 %v433, %v58
  %v458 = vmul.f32 %v450, %v59
  %v459 = vmul.f32 %v451, %v59
  %v460 = vmul.f32 %v452, %v59
  %v461 = vmul.f32 %v453, %v59
  %v462 = vadd.f32 %v454, %v458
  %v463 = vadd.f32 %v455, %v459
  %v464 = vadd.f32 %v456, %v460
  %v465 = vadd.f32 %v457, %v461
  %v466 = vadd.f32 %v462, 1e-05
  %v467 = vadd.f32 %v463, 1e-05
  %v468 = vadd.f32 %v464, 1e-05
  %v469 = vadd.f32 %v465, 1e-05
  %v470 = vrsqrt.pop %v466
  %v471 = vrsqrt.pop %v467
  %v472 = vrsqrt.pop %v468
  %v473 = vrsqrt.pop %v469
  %v474 = vmul.f32 %v406, %v470
  %v475 = vmul.f32 %v407, %v471
  %v476 = vmul.f32 %v408, %v472
  %v477 = vmul.f32 %v409, %v473
  %v478 = vlaneseq
  %v479 = vshrl.u32 %v478, 7
  %v480 = vsub.s32 0, %v479
  %v481 = vrot.slane %v109, %v480
  %v482 = vmul.f32 %v474, %v481
  %v483 = vmul.f32 %v475, %v481
  %v484 = vmul.f32 %v476, %v481
  %v485 = vmul.f32 %v477, %v481
  %v486 = vlaneseq
  %v487 = vshrl.u32 %v486, 7
  %v488 = vsub.s32 0, %v487
  %v489 = vrot.slane %v110, %v488
  %v490 = vadd.f32 %v482, %v489
  %v491 = vadd.f32 %v483, %v489
  %v492 = vadd.f32 %v484, %v489
  %v493 = vadd.f32 %v485, %v489
  %v494 = vrot.slane %v490, 7
  %v495 = vrot.slane %v491, 7
  %v496 = vrot.slane %v492, 7
  %v497 = vrot.slane %v493, 7
  %v498 = vsel %vm175, %v496, %v497
  %v499 = vsel %vm175, %v495, %v496
  %v500 = vsel %vm175, %v494, %v495
  %v501 = vsel %vm175, %v497, %v494
  %v502 = vmul.f32 %v501, %v200
  %v503 = vmul.f32 %v500, %v201
  %v504 = vmul.f32 %v499, %v202
  %v505 = vmul.f32 %v498, %v203
  %v506 = vrot.slane %v490, 1
  %v507 = vrot.slane %v491, 1
  %v508 = vrot.slane %v492, 1
  %v509 = vrot.slane %v493, 1
  %v510 = vsel %vm212, %v508, %v509
  %v511 = vsel %vm212, %v507, %v508
  %v512 = vsel %vm212, %v506, %v507
  %v513 = vsel %vm212, %v509, %v506
  %v514 = vmul.f32 %v512, %v237
  %v515 = vmul.f32 %v511, %v238
  %v516 = vmul.f32 %v510, %v239
  %v517 = vmul.f32 %v513, %v240
  %522 = vrot.lane.b32.xlu0 %v490, 64
  %v523 = vpop.permute.xlu0 %522
  %524 = vrot.lane.b32.xlu0 %v491, 64
  %v525 = vpop.permute.xlu0 %524
  %526 = vrot.lane.b32.xlu0 %v492, 64
  %v527 = vpop.permute.xlu0 %526
  %528 = vrot.lane.b32.xlu0 %v493, 64
  %v529 = vpop.permute.xlu0 %528
  %v534 = vsel %vm282, %v502, %v523
  %v535 = vsel %vm282, %v503, %v525
  %v536 = vsel %vm282, %v504, %v527
  %v537 = vsel %vm282, %v505, %v529
  %v538 = vpack.c.bf16 %v535, %v534
  %v539 = vpack.c.bf16 %v515, %v514
  %v540 = vpack.c.bf16 %v537, %v536
  %v541 = vpack.c.bf16 %v517, %v516
  %v542 = vlaneseq
  %v543 = vshrl.u32 %v542, 7
  %v544 = vsub.s32 0, %v543
  %v545 = vrot.slane %v111, %v544
  %v547 = vsel %vm282, %v539, 0
  %v550 = vsel %vm282, %v541, 0
  %552 = vmatprep.subr.bf16.mxu0 0
  %553 = vmatpush1.bf16.msra.mxu0 %v159
  %554 = vmatprep.subr.bf16.mxu0 0
  %555 = vmatpush1.bf16.msra.mxu0 %v160
  %556 = vmatprep.subr.bf16.mxu0 0
  %557 = vmatpush1.bf16.msra.mxu0 %v161
  %558 = vmatprep.subr.bf16.mxu0 0
  %559 = vmatpush1.bf16.msra.mxu0 %v162
  %560 = vmatprep.subr.bf16.mxu0 0
  %561 = vmatpush1.bf16.msra.mxu0 %v163
  %562 = vmatprep.subr.bf16.mxu0 0
  %563 = vmatpush1.bf16.msra.mxu0 %v164
  %564 = vmatprep.subr.bf16.mxu0 0
  %565 = vmatpush1.bf16.msra.mxu0 %v165
  %566 = vmatprep.subr.bf16.mxu0 0
  %567 = vmatpush1.bf16.msra.mxu0 %v166
  %568 = vmatprep.subr.bf16.mxu0 0
  %569 = vmatpush1.bf16.msra.mxu0 %v167
  %570 = vmatprep.subr.bf16.mxu0 0
  %571 = vmatpush1.bf16.msra.mxu0 %v168
  %572 = vmatprep.subr.bf16.mxu0 0
  %573 = vmatpush1.bf16.msra.mxu0 %v169
  %574 = vmatprep.subr.bf16.mxu0 0
  %575 = vmatpush1.bf16.msra.mxu0 %v170
  %576 = vmatprep.subr.bf16.mxu0 0
  %577 = vmatpush1.bf16.msra.mxu0 0
  %578 = vmatprep.subr.bf16.mxu0 0
  %579 = vmatpush1.bf16.msra.mxu0 0
  %580 = vmatprep.subr.bf16.mxu0 0
  %581 = vmatpush1.bf16.msra.mxu0 0
  %582 = vmatprep.subr.bf16.mxu0 0
  %583 = vmatpush1.bf16.msra.mxu0 0
  %584 = vmatprep.mubr.bf16.mxu0 %v547
  %585 = vmatmul.mubr.bf16.gmra.mrb[0].mxu0 %v538
  %v586 = vpop.f32.mrb[0].mxu0
  %v587 = vadd.f32 %v545, %v586
  %v588 = vpop.f32.mrb[0].mxu0
  %v589 = vpop.f32.mrb[0].mxu0
  %v590 = vadd.f32 %v545, %v589
  %v591 = vpop.f32.mrb[0].mxu0
  %592 = vmatprep.mubr.bf16.mxu0 %v550
  %593 = vmatmul.mubr.bf16.gmra.mrb[0].mxu0 %v540
  %v594 = vpop.f32.mrb[0].mxu0
  %v595 = vadd.f32 %v545, %v594
  %v596 = vpop.f32.mrb[0].mxu0
  %v597 = vpop.f32.mrb[0].mxu0
  %v598 = vadd.f32 %v545, %v597
  %v599 = vpop.f32.mrb[0].mxu0
  %600 = vdwg.mxu0
  %v601 = vmax.f32 %v587, 0.0
  %v602 = vmax.f32 %v590, 0.0
  %v603 = vmax.f32 %v595, 0.0
  %v604 = vmax.f32 %v598, 0.0
  %v605 = vmul.f32 %v601, %v58
  %v606 = vmul.f32 %v602, %v58
  %v607 = vmul.f32 %v603, %v58
  %v608 = vmul.f32 %v604, %v58
  %v609 = vsel %vm282, %v605, 0.0
  %610 = vadd.xlane.f32.xlu0 %v609
  %v611 = vpop.xlane.xlu0 %610
  %v612 = vsel %vm282, %v606, 0.0
  %613 = vadd.xlane.f32.xlu0 %v612
  %v614 = vpop.xlane.xlu0 %613
  %v615 = vsel %vm282, %v607, 0.0
  %616 = vadd.xlane.f32.xlu0 %v615
  %v617 = vpop.xlane.xlu0 %616
  %v618 = vsel %vm282, %v608, 0.0
  %619 = vadd.xlane.f32.xlu0 %v618
  %v620 = vpop.xlane.xlu0 %619
  %v621 = vmul.f32 %v611, %v369
  %v622 = vmul.f32 %v614, %v369
  %v623 = vmul.f32 %v617, %v369
  %v624 = vmul.f32 %v620, %v369
  %v625 = vmul.f32 %v601, %v59
  %v626 = vmul.f32 %v602, %v59
  %v627 = vmul.f32 %v603, %v59
  %v628 = vmul.f32 %v604, %v59
  %v629 = vsel %vm282, %v625, 0.0
  %630 = vadd.xlane.f32.xlu0 %v629
  %v631 = vpop.xlane.xlu0 %630
  %v632 = vsel %vm282, %v626, 0.0
  %633 = vadd.xlane.f32.xlu0 %v632
  %v634 = vpop.xlane.xlu0 %633
  %v635 = vsel %vm282, %v627, 0.0
  %636 = vadd.xlane.f32.xlu0 %v635
  %v637 = vpop.xlane.xlu0 %636
  %v638 = vsel %vm282, %v628, 0.0
  %639 = vadd.xlane.f32.xlu0 %v638
  %v640 = vpop.xlane.xlu0 %639
  %v641 = vmul.f32 %v631, %v369
  %v642 = vmul.f32 %v634, %v369
  %v643 = vmul.f32 %v637, %v369
  %v644 = vmul.f32 %v640, %v369
  %v645 = vmul.f32 %v621, %v58
  %v646 = vmul.f32 %v622, %v58
  %v647 = vmul.f32 %v623, %v58
  %v648 = vmul.f32 %v624, %v58
  %v649 = vmul.f32 %v641, %v59
  %v650 = vmul.f32 %v642, %v59
  %v651 = vmul.f32 %v643, %v59
  %v652 = vmul.f32 %v644, %v59
  %v653 = vadd.f32 %v645, %v649
  %v654 = vadd.f32 %v646, %v650
  %v655 = vadd.f32 %v647, %v651
  %v656 = vadd.f32 %v648, %v652
  %v657 = vsub.f32 %v601, %v653
  %v658 = vsub.f32 %v602, %v654
  %v659 = vsub.f32 %v603, %v655
  %v660 = vsub.f32 %v604, %v656
  %v661 = vmul.f32 %v657, %v657
  %v662 = vmul.f32 %v658, %v658
  %v663 = vmul.f32 %v659, %v659
  %v664 = vmul.f32 %v660, %v660
  %v665 = vmul.f32 %v661, %v58
  %v666 = vmul.f32 %v662, %v58
  %v667 = vmul.f32 %v663, %v58
  %v668 = vmul.f32 %v664, %v58
  %v669 = vsel %vm282, %v665, 0.0
  %670 = vadd.xlane.f32.xlu0 %v669
  %v671 = vpop.xlane.xlu0 %670
  %v672 = vsel %vm282, %v666, 0.0
  %673 = vadd.xlane.f32.xlu0 %v672
  %v674 = vpop.xlane.xlu0 %673
  %v675 = vsel %vm282, %v667, 0.0
  %676 = vadd.xlane.f32.xlu0 %v675
  %v677 = vpop.xlane.xlu0 %676
  %v678 = vsel %vm282, %v668, 0.0
  %679 = vadd.xlane.f32.xlu0 %v678
  %v680 = vpop.xlane.xlu0 %679
  %v681 = vmul.f32 %v671, %v369
  %v682 = vmul.f32 %v674, %v369
  %v683 = vmul.f32 %v677, %v369
  %v684 = vmul.f32 %v680, %v369
  %v685 = vmul.f32 %v661, %v59
  %v686 = vmul.f32 %v662, %v59
  %v687 = vmul.f32 %v663, %v59
  %v688 = vmul.f32 %v664, %v59
  %v689 = vsel %vm282, %v685, 0.0
  %690 = vadd.xlane.f32.xlu0 %v689
  %v691 = vpop.xlane.xlu0 %690
  %v692 = vsel %vm282, %v686, 0.0
  %693 = vadd.xlane.f32.xlu0 %v692
  %v694 = vpop.xlane.xlu0 %693
  %v695 = vsel %vm282, %v687, 0.0
  %696 = vadd.xlane.f32.xlu0 %v695
  %v697 = vpop.xlane.xlu0 %696
  %v698 = vsel %vm282, %v688, 0.0
  %699 = vadd.xlane.f32.xlu0 %v698
  %v700 = vpop.xlane.xlu0 %699
  %v701 = vmul.f32 %v691, %v369
  %v702 = vmul.f32 %v694, %v369
  %v703 = vmul.f32 %v697, %v369
  %v704 = vmul.f32 %v700, %v369
  %v705 = vmul.f32 %v681, %v58
  %v706 = vmul.f32 %v682, %v58
  %v707 = vmul.f32 %v683, %v58
  %v708 = vmul.f32 %v684, %v58
  %v709 = vmul.f32 %v701, %v59
  %v710 = vmul.f32 %v702, %v59
  %v711 = vmul.f32 %v703, %v59
  %v712 = vmul.f32 %v704, %v59
  %v713 = vadd.f32 %v705, %v709
  %v714 = vadd.f32 %v706, %v710
  %v715 = vadd.f32 %v707, %v711
  %v716 = vadd.f32 %v708, %v712
  %v717 = vadd.f32 %v713, 1e-05
  %v718 = vadd.f32 %v714, 1e-05
  %v719 = vadd.f32 %v715, 1e-05
  %v720 = vadd.f32 %v716, 1e-05
  %v721 = vrsqrt.pop %v717
  %v722 = vrsqrt.pop %v718
  %v723 = vrsqrt.pop %v719
  %v724 = vrsqrt.pop %v720
  %v725 = vmul.f32 %v657, %v721
  %v726 = vmul.f32 %v658, %v722
  %v727 = vmul.f32 %v659, %v723
  %v728 = vmul.f32 %v660, %v724
  %v729 = vlaneseq
  %v730 = vshrl.u32 %v729, 7
  %v731 = vsub.s32 0, %v730
  %v732 = vrot.slane %v112, %v731
  %v733 = vmul.f32 %v725, %v732
  %v734 = vmul.f32 %v726, %v732
  %v735 = vmul.f32 %v727, %v732
  %v736 = vmul.f32 %v728, %v732
  %v737 = vlaneseq
  %v738 = vshrl.u32 %v737, 7
  %v739 = vsub.s32 0, %v738
  %v740 = vrot.slane %v113, %v739
  %v741 = vadd.f32 %v733, %v740
  %v742 = vadd.f32 %v734, %v740
  %v743 = vadd.f32 %v735, %v740
  %v744 = vadd.f32 %v736, %v740
  %v745 = vlaneseq
  %v746 = vshrl.u32 %v745, 7
  %v747 = vsub.s32 0, %v746
  %v748 = vrot.slane %v114, %v747
  %v749 = vmul.f32 %v741, %v748
  %v750 = vmul.f32 %v742, %v748
  %v751 = vmul.f32 %v743, %v748
  %v752 = vmul.f32 %v744, %v748
  %v753 = vsel %vm282, %v749, 0.0
  %754 = vadd.xlane.f32.xlu0 %v753
  %v755 = vpop.xlane.xlu0 %754
  %v756 = vsel %vm282, %v750, 0.0
  %757 = vadd.xlane.f32.xlu0 %v756
  %v758 = vpop.xlane.xlu0 %757
  %v759 = vsel %vm282, %v751, 0.0
  %760 = vadd.xlane.f32.xlu0 %v759
  %v761 = vpop.xlane.xlu0 %760
  %v762 = vsel %vm282, %v752, 0.0
  %763 = vadd.xlane.f32.xlu0 %v762
  %v764 = vpop.xlane.xlu0 %763
  %v765 = vlaneseq
  %v766 = vshrl.u32 %v765, 7
  %v767 = vsub.s32 0, %v766
  %v768 = vrot.slane %v116, %v767
  %v769 = vadd.f32 %v755, %v768
  %v770 = vadd.f32 %v758, %v768
  %v771 = vadd.f32 %v761, %v768
  %v772 = vadd.f32 %v764, %v768
  %v773 = vmul.f32 %v769, %v96
  %v774 = vmul.f32 %v770, %v97
  %v775 = vmul.f32 %v771, %v98
  %v776 = vmul.f32 %v772, %v99
  %v777 = vlaneseq
  %v778 = vshrl.u32 %v777, 7
  %v779 = vsub.s32 0, %v778
  %v780 = vrot.slane %v115, %v779
  %v781 = vmul.f32 %v741, %v780
  %v782 = vmul.f32 %v742, %v780
  %v783 = vmul.f32 %v743, %v780
  %v784 = vmul.f32 %v744, %v780
  %v785 = vsel %vm282, %v781, 0.0
  %786 = vadd.xlane.f32.xlu0 %v785
  %v787 = vpop.xlane.xlu0 %786
  %v788 = vsel %vm282, %v782, 0.0
  %789 = vadd.xlane.f32.xlu0 %v788
  %v790 = vpop.xlane.xlu0 %789
  %v791 = vsel %vm282, %v783, 0.0
  %792 = vadd.xlane.f32.xlu0 %v791
  %v793 = vpop.xlane.xlu0 %792
  %v794 = vsel %vm282, %v784, 0.0
  %795 = vadd.xlane.f32.xlu0 %v794
  %v796 = vpop.xlane.xlu0 %795
  %v797 = vadd.f32 %v787, %v768
  %v798 = vadd.f32 %v790, %v768
  %v799 = vadd.f32 %v793, %v768
  %v800 = vadd.f32 %v796, %v768
  %v801 = vmul.f32 %v797, %v96
  %v802 = vmul.f32 %v798, %v97
  %v803 = vmul.f32 %v799, %v98
  %v804 = vmul.f32 %v800, %v99
  %v805 = vld [vmem:[%s5] sm:$0x1]
  %807 = vset.pattern.permute.xlu0 1
  %808 = vperm.xlu0 %807, %v801
  %v809 = vpop.permute.xlu0 %808
  %812 = vset.pattern.permute.xlu0 1
  %813 = vperm.xlu0 %812, %v802
  %v814 = vpop.permute.xlu0 %813
  %817 = vset.pattern.permute.xlu0 1
  %818 = vperm.xlu0 %817, %v803
  %v819 = vpop.permute.xlu0 %818
  %822 = vset.pattern.permute.xlu0 1
  %823 = vperm.xlu0 %822, %v804
  %v824 = vpop.permute.xlu0 %823
  %v827 = vlaneseq
  %v828 = vshrl.u32 %v827, 7
  %v829 = vsub.s32 0, %v828
  %v830 = vrot.slane %v805, %v829
  %vm832 = vcmp.gt.f32.partialorder %v809, %v830
  %vm833 = vcmp.gt.f32.partialorder %v814, %v830
  %vm834 = vcmp.gt.f32.partialorder %v819, %v830
  %vm835 = vcmp.gt.f32.partialorder %v824, %v830
  %v836 = vsel %vm832, 1, 0
  %v837 = vsel %vm833, 1, 0
  %v838 = vsel %vm834, 1, 0
  %v839 = vsel %vm835, 1, 0
  %vm840 = vcmask 121856
  %v841 = vsel %vm840, %v836, 0
  %v842 = vand.u32 %v841, 65535
  %v843 = vshrl.u32 %v841, 16
  %v844 = vcvt.s32.f32 %v842
  %v845 = vcvt.s32.f32 %v843
  %846 = vadd.xlane.f32.xlu0 %v844
  %v847 = vpop.xlane.xlu0 %846
  %848 = vadd.xlane.f32.xlu0 %v845
  %v849 = vpop.xlane.xlu0 %848
  %v850 = vcvt.f32.s32 %v847
  %v851 = vcvt.f32.s32 %v849
  %v852 = vshll.u32 %v851, 16
  %v853 = vadd.s32 %v852, %v850
  %v854 = vsel %vm840, %v837, 0
  %v855 = vand.u32 %v854, 65535
  %v856 = vshrl.u32 %v854, 16
  %v857 = vcvt.s32.f32 %v855
  %v858 = vcvt.s32.f32 %v856
  %859 = vadd.xlane.f32.xlu0 %v857
  %v860 = vpop.xlane.xlu0 %859
  %861 = vadd.xlane.f32.xlu0 %v858
  %v862 = vpop.xlane.xlu0 %861
  %v863 = vcvt.f32.s32 %v860
  %v864 = vcvt.f32.s32 %v862
  %v865 = vshll.u32 %v864, 16
  %v866 = vadd.s32 %v865, %v863
  %v867 = vsel %vm840, %v838, 0
  %v868 = vand.u32 %v867, 65535
  %v869 = vshrl.u32 %v867, 16
  %v870 = vcvt.s32.f32 %v868
  %v871 = vcvt.s32.f32 %v869
  %872 = vadd.xlane.f32.xlu0 %v870
  %v873 = vpop.xlane.xlu0 %872
  %874 = vadd.xlane.f32.xlu0 %v871
  %v875 = vpop.xlane.xlu0 %874
  %v876 = vcvt.f32.s32 %v873
  %v877 = vcvt.f32.s32 %v875
  %v878 = vshll.u32 %v877, 16
  %v879 = vadd.s32 %v878, %v876
  %v880 = vsel %vm840, %v839, 0
  %v881 = vand.u32 %v880, 65535
  %v882 = vshrl.u32 %v880, 16
  %v883 = vcvt.s32.f32 %v881
  %v884 = vcvt.s32.f32 %v882
  %885 = vadd.xlane.f32.xlu0 %v883
  %v886 = vpop.xlane.xlu0 %885
  %887 = vadd.xlane.f32.xlu0 %v884
  %v888 = vpop.xlane.xlu0 %887
  %v889 = vcvt.f32.s32 %v886
  %v890 = vcvt.f32.s32 %v888
  %v891 = vshll.u32 %v890, 16
  %v892 = vadd.s32 %v891, %v889
  %vm893 = vcmp.eq.s32.totalorder %v853, %v55
  %vm894 = vcmp.eq.s32.totalorder %v866, %v55
  %vm895 = vcmp.eq.s32.totalorder %v879, %v55
  %vm896 = vcmp.eq.s32.totalorder %v892, %v55
  %v897 = vsel %vm893, 1, 0
  %v898 = vsel %vm894, 1, 0
  %v899 = vsel %vm895, 1, 0
  %v900 = vsel %vm896, 1, 0
  %v901 = vcvt.s32.f32 %v897
  %v902 = vcvt.s32.f32 %v898
  %v903 = vcvt.s32.f32 %v899
  %v904 = vcvt.s32.f32 %v900
  %v905 = vld [vmem:[%s6] sm:$0xff]
  %v906 = vld [vmem:[%s6 + $0x8] sm:$0xff]
  %vm907 = vcmask 130048
  %v909 = vsel %vm907, %v901, 0
  %v912 = vsel %vm907, %v902, 0
  %v915 = vsel %vm907, %v903, 0
  %v918 = vsel %vm907, %v904, 0
  %920 = vmatprep.subr.mxu0 0.0
  %921 = vmatpush1.msra.mxu0 %v905
  %922 = vmatprep.subr.mxu0 0.0
  %923 = vmatpush1.msra.mxu0 %v906
  %924 = vmatprep.subr.mxu0 0.0
  %925 = vmatpush1.msra.mxu0 0.0
  %926 = vmatprep.subr.mxu0 0.0
  %927 = vmatpush1.msra.mxu0 0.0
  %928 = vmatprep.subr.mxu0 0.0
  %929 = vmatpush1.msra.mxu0 0.0
  %930 = vmatprep.subr.mxu0 0.0
  %931 = vmatpush1.msra.mxu0 0.0
  %932 = vmatprep.subr.mxu0 0.0
  %933 = vmatpush1.msra.mxu0 0.0
  %934 = vmatprep.subr.mxu0 0.0
  %935 = vmatpush1.msra.mxu0 0.0
  %936 = vmatprep.subr.mxu0 0.0
  %937 = vmatpush1.msra.mxu0 0.0
  %938 = vmatprep.subr.mxu0 0.0
  %939 = vmatpush1.msra.mxu0 0.0
  %940 = vmatprep.subr.mxu0 0.0
  %941 = vmatpush1.msra.mxu0 0.0
  %942 = vmatprep.subr.mxu0 0.0
  %943 = vmatpush1.msra.mxu0 0.0
  %944 = vmatprep.subr.mxu0 0.0
  %945 = vmatpush1.msra.mxu0 0.0
  %946 = vmatprep.subr.mxu0 0.0
  %947 = vmatpush1.msra.mxu0 0.0
  %948 = vmatprep.subr.mxu0 0.0
  %949 = vmatpush1.msra.mxu0 0.0
  %950 = vmatprep.subr.mxu0 0.0
  %951 = vmatpush1.msra.mxu0 0.0
  %952 = vmatprep.subr.mxu0 0.0
  %953 = vmatpush1.msra.mxu0 0.0
  %954 = vmatprep.subr.mxu0 0.0
  %955 = vmatpush1.msra.mxu0 0.0
  %956 = vmatprep.subr.mxu0 0.0
  %957 = vmatpush1.msra.mxu0 0.0
  %958 = vmatprep.subr.mxu0 0.0
  %959 = vmatpush1.msra.mxu0 0.0
  %960 = vmatprep.subr.mxu0 0.0
  %961 = vmatpush1.msra.mxu0 0.0
  %962 = vmatprep.subr.mxu0 0.0
  %963 = vmatpush1.msra.mxu0 0.0
  %964 = vmatprep.subr.mxu0 0.0
  %965 = vmatpush1.msra.mxu0 0.0
  %966 = vmatprep.subr.mxu0 0.0
  %967 = vmatpush1.msra.mxu0 0.0
  %968 = vmatprep.subr.mxu0 0.0
  %969 = vmatpush1.msra.mxu0 0.0
  %970 = vmatprep.subr.mxu0 0.0
  %971 = vmatpush1.msra.mxu0 0.0
  %972 = vmatprep.subr.mxu0 0.0
  %973 = vmatpush1.msra.mxu0 0.0
  %974 = vmatprep.subr.mxu0 0.0
  %975 = vmatpush1.msra.mxu0 0.0
  %976 = vmatprep.subr.mxu0 0.0
  %977 = vmatpush1.msra.mxu0 0.0
  %978 = vmatprep.subr.mxu0 0.0
  %979 = vmatpush1.msra.mxu0 0.0
  %980 = vmatprep.subr.mxu0 0.0
  %981 = vmatpush1.msra.mxu0 0.0
  %982 = vmatprep.subr.mxu0 0.0
  %983 = vmatpush1.msra.mxu0 0.0
  %984 = vmatprep.mubr.f32.mxu0 0.0
  %985 = vmatmul.mubr.f32.gmra.mrb[0].mxu0 %v909
  %v986 = vpop.f32.mrb[0].mxu0
  %v987 = vadd.f32 0.0, %v986
  %v988 = vpop.f32.mrb[0].mxu0
  %989 = vmatprep.mubr.f32.mxu0 0.0
  %990 = vmatmul.mubr.f32.gmra.mrb[0].mxu0 %v912
  %v991 = vpop.f32.mrb[0].mxu0
  %v992 = vadd.f32 0.0, %v991
  %v993 = vpop.f32.mrb[0].mxu0
  %994 = vmatprep.mubr.f32.mxu0 0.0
  %995 = vmatmul.mubr.f32.gmra.mrb[0].mxu0 %v915
  %v996 = vpop.f32.mrb[0].mxu0
  %v997 = vadd.f32 0.0, %v996
  %v998 = vpop.f32.mrb[0].mxu0
  %999 = vmatprep.mubr.f32.mxu0 0.0
  %1000 = vmatmul.mubr.f32.gmra.mrb[0].mxu0 %v918
  %v1001 = vpop.f32.mrb[0].mxu0
  %v1002 = vadd.f32 0.0, %v1001
  %v1003 = vpop.f32.mrb[0].mxu0
  %1004 = vdwg.mxu0
  %v1005 = vadd.f32 %v100, %v987
  %v1006 = vadd.f32 %v101, %v992
  %v1007 = vadd.f32 %v102, %v997
  %v1008 = vadd.f32 %v103, %v1002
  %1009 = vst.msk [vmem:[%s7] sm:$0xff] %vm277, %v1005
  %1010 = vst.msk [vmem:[%s7 + $0x8] sm:$0xff] %vm277, %v1006
  %1011 = vst.msk [vmem:[%s7 + $0x10] sm:$0xff] %vm277, %v1007
  %1012 = vst.msk [vmem:[%s7 + $0x18] sm:$0xff] %vm277, %v1008
  %vm1013 = vcmask 7168
  %v1014 = vsel %vm1013, %v773, %v801
  %v1015 = vsel %vm1013, %v774, %v802
  %v1016 = vsel %vm1013, %v775, %v803
  %v1017 = vsel %vm1013, %v776, %v804
  %vm1018 = vcmask 15360
  %1019 = vst.msk [vmem:[%s8] sm:$0xff] %vm1018, %v1014
  %1020 = vst.msk [vmem:[%s8 + $0x8] sm:$0xff] %vm1018, %v1015
  %1021 = vst.msk [vmem:[%s8 + $0x10] sm:$0xff] %vm1018, %v1016
  %1022 = vst.msk [vmem:[%s8 + $0x18] sm:$0xff] %vm1018, %v1017
  // Predicated region
  $region26: #{_variance_adaptor_forward.1} parent=0 // pred_check
    _
  $region27: #{_variance_adaptor_forward.1} parent=0 // pred_check_branch
    %1024 = sbr.rel (0) target = $region29
  $region28: #{_variance_adaptor_forward.1} parent=0 // pred_region
    _
  $region29: #{_variance_adaptor_forward.1} parent=0 // pred_fallthru
    _
  // Predicated region
  $region30: #{_variance_adaptor_forward.1} parent=0 // pred_check
    _
  $region31: #{_variance_adaptor_forward.1} parent=0 // pred_check_branch
    %1026 = sbr.rel (0) target = $region33
  $region32: #{_variance_adaptor_forward.1} parent=0 // pred_region
    _
  $region33: #{_variance_adaptor_forward.1} parent=0 // pred_fallthru
    _
  // Predicated region
  $region34: #{_variance_adaptor_forward.1} parent=0 // pred_check
    _
  $region35: #{_variance_adaptor_forward.1} parent=0 // pred_check_branch
    %1028 = sbr.rel (0) target = $region37
  $region36: #{_variance_adaptor_forward.1} parent=0 // pred_region
    _
  $region37: #{_variance_adaptor_forward.1} parent=0 // pred_fallthru
    _
  // Predicated region
  $region38: #{_variance_adaptor_forward.1} parent=0 // pred_check
    _
  $region39: #{_variance_adaptor_forward.1} parent=0 // pred_check_branch
    %1030 = sbr.rel (0) target = $region41
  $region40: #{_variance_adaptor_forward.1} parent=0 // pred_region
    _
  $region41: #{_variance_adaptor_forward.1} parent=0 // pred_fallthru
    _

</llo_original>
